<compile_context>
chip_gen: v7x
topology: tpu7x:2x2x1
jax: 0.10.0
libtpu: 0.0.40
codegen_flags: <defaults>
</compile_context>

<pallas_src>
import jax
import jax.numpy as jnp
from jax.experimental import pallas as pl
from jax.experimental.pallas import tpu as pltpu


def mean_vfe_kernel(feat_ref, cnt_ref, out_ref):
    # feat_ref: (TV, P, C) zero-padded per-point features
    # cnt_ref : (TV, 1)    int32 true point counts
    # out_ref : (TV, C)    mean-pooled voxel features
    P = feat_ref.shape[1]
    if feat_ref.dtype == jnp.float32:
        summed = jnp.sum(feat_ref[...], axis=1)            # XLU sublane reduce
    else:
        # Accumulate narrow dtypes in f32 one point-slice at a time so we
        # never materialize a widened copy of the whole (TV, P, C) block.
        summed = feat_ref[:, 0, :].astype(jnp.float32)
        for p in range(1, P):                               # static unroll, P small
            summed = summed + feat_ref[:, p, :].astype(jnp.float32)
    cnt = jnp.maximum(cnt_ref[...].astype(jnp.float32), 1.0)   # (TV, 1)
    inv = pl.reciprocal(cnt, approx=False)                     # exact; EUP slot is idle
    out_ref[...] = (summed * inv).astype(out_ref.dtype)


def _vmem_capacity_bytes():
    try:
        return int(pltpu.get_tpu_info().vmem_capacity_bytes)
    except Exception:
        return 64 << 20  # conservative fallback (v7x per-TensorCore VMEM)


def mean_vfe(voxel_features, voxel_num_points, *, tile_voxels=1024, out_dtype=None):
    """voxel_features  : (V, P, C) float (f32 or bf16), zero-padded past the true count.
       voxel_num_points: (V,) or (V, 1) int32 (padded voxels carry count 0).
       returns vfe_features: (V, C) -- VFETemplate's documented output contract."""
    V, P, C = voxel_features.shape
    out_dtype = voxel_features.dtype if out_dtype is None else out_dtype
    counts = voxel_num_points.reshape(V, 1).astype(jnp.int32)

    # --- generation-aware tile sizing --------------------------------------
    vmem_cap = _vmem_capacity_bytes()
    vmem_limit = min(vmem_cap // 2, 64 << 20)      # ~32 MiB on v7x, 64 MiB on v5e/v6e
    block_budget = (vmem_limit * 3) // 4           # headroom for Mosaic scratch
    bytes_per_voxel = (P * C * voxel_features.dtype.itemsize
                       + C * jnp.dtype(out_dtype).itemsize
                       + 4)
    tile_vmem_cap = max(1, block_budget // (2 * bytes_per_voxel))  # 2 = double buffer

    tile = min(tile_voxels, tile_vmem_cap, V)
    if V >= 16:
        tile = min(tile, V // 2)        # >= 2 grid steps -> both v7x TCs get work
    if tile < V:
        tile = max(8, (tile // 8) * 8)  # sublane-aligned output rows
    tile = min(tile, V)

    feat_spec_kwargs = {}
    if tile_vmem_cap < 512 and tile < 512:
        # VMEM-constrained (large P*C): deepen the pipeline rather than shrink more.
        feat_spec_kwargs["pipeline_mode"] = pl.Buffered(3)

    grid = (pl.cdiv(V, tile),)
    return pl.pallas_call(
        mean_vfe_kernel,
        out_shape=jax.ShapeDtypeStruct((V, C), out_dtype),
        grid_spec=pltpu.PrefetchScalarGridSpec(
            num_scalar_prefetch=0,
            grid=grid,
            in_specs=[
                pl.BlockSpec((tile, P, C), lambda i: (i, 0, 0), **feat_spec_kwargs),
                pl.BlockSpec((tile, 1), lambda i: (i, 0)),
            ],
            out_specs=pl.BlockSpec((tile, C), lambda i: (i, 0)),
        ),
        compiler_params=pltpu.CompilerParams(
            dimension_semantics=("parallel",),
            vmem_limit_bytes=vmem_limit,
        ),
    )(voxel_features, counts)


if __name__ == "__main__":
    key = jax.random.PRNGKey(0)
    k1, k2, k3, k4 = jax.random.split(key, 4)

    # ---- demo 1: f32, V multiple of the tile, C=128 (lane-dense) ----------
    V1, P1, C1 = 256, 8, 128
    feats1 = jax.random.normal(k1, (V1, P1, C1), dtype=jnp.float32)
    cnt1 = jax.random.randint(k2, (V1,), minval=1, maxval=P1 + 1, dtype=jnp.int32)
    valid1 = (jnp.arange(P1)[None, :, None] < cnt1[:, None, None]).astype(feats1.dtype)
    feats1 = feats1 * valid1

    out1 = jax.block_until_ready(mean_vfe(feats1, cnt1))
    ref1 = feats1.sum(axis=1) / jnp.maximum(cnt1, 1).astype(jnp.float32)[:, None]
    assert out1.shape == (V1, C1)
    assert jnp.allclose(out1, ref1, atol=1e-5, rtol=1e-5)

    # ---- demo 2: bf16 input, V NOT a multiple of the tile (partial edge
    #      block), some empty voxels (count 0) -----------------------------
    V2, P2, C2 = 200, 8, 128
    feats2 = jax.random.normal(k3, (V2, P2, C2), dtype=jnp.float32)
    cnt2 = jax.random.randint(k4, (V2,), minval=0, maxval=P2 + 1, dtype=jnp.int32)
    valid2 = (jnp.arange(P2)[None, :, None] < cnt2[:, None, None]).astype(feats2.dtype)
    feats2 = (feats2 * valid2).astype(jnp.bfloat16)

    out2 = jax.block_until_ready(mean_vfe(feats2, cnt2))
    ref2 = (feats2.astype(jnp.float32).sum(axis=1)
            / jnp.maximum(cnt2, 1).astype(jnp.float32)[:, None])
    assert out2.shape == (V2, C2)
    assert jnp.allclose(out2.astype(jnp.float32), ref2, atol=5e-2, rtol=2e-2)

    print("KERNEL_OK")
</pallas_src>

<mosaic_0001>
module attributes {stable_mosaic.version = 11 : i64} {
  func.func @mean_vfe_kernel(%arg0: i32, %arg1: memref<128x8x128xf32, #tpu.memory_space<vmem>>, %arg2: memref<128x1xi32, #tpu.memory_space<vmem>>, %arg3: memref<128x128xf32, #tpu.memory_space<vmem>>) attributes {dimension_semantics = [#tpu.dimension_semantics<parallel>], iteration_bounds = array<i64: 2>, scalar_prefetch = 0 : i64, scratch_operands = 0 : i64, tpu.core_type = #tpu.core_type<tc>, window_params = [{transform_indices = @transform_0, window_bounds = array<i64: 128, 8, 128>}, {transform_indices = @transform_1, window_bounds = array<i64: 128, 1>}, {transform_indices = @transform_2, window_bounds = array<i64: 128, 128>}]} {
    %c0 = arith.constant 0 : index
    %c0_0 = arith.constant 0 : index
    %c0_1 = arith.constant 0 : index
    %0 = vector.load %arg1[%c0, %c0_0, %c0_1] : memref<128x8x128xf32, #tpu.memory_space<vmem>>, vector<128x8x128xf32>
    %cst = arith.constant dense<0.000000e+00> : vector<128x128xf32>
    %1 = vector.multi_reduction <add>, %0, %cst [1] : vector<128x8x128xf32> to vector<128x128xf32>
    %c0_2 = arith.constant 0 : index
    %c0_3 = arith.constant 0 : index
    %2 = vector.load %arg2[%c0_2, %c0_3] : memref<128x1xi32, #tpu.memory_space<vmem>>, vector<128x1xi32>
    %3 = arith.sitofp %2 : vector<128x1xi32> to vector<128x1xf32>
    %cst_4 = arith.constant 1.000000e+00 : f32
    %4 = vector.broadcast %cst_4 : f32 to vector<128x1xf32>
    %5 = arith.maximumf %3, %4 : vector<128x1xf32>
    %6 = tpu.reciprocal %5 : vector<128x1xf32> -> vector<128x1xf32>
    %7 = vector.broadcast %6 : vector<128x1xf32> to vector<128x128xf32>
    %8 = arith.mulf %1, %7 : vector<128x128xf32>
    %c0_5 = arith.constant 0 : index
    %c0_6 = arith.constant 0 : index
    %9 = vector.load %arg3[%c0_5, %c0_6] : memref<128x128xf32, #tpu.memory_space<vmem>>, vector<128x128xf32>
    tpu.vector_store %arg3[%c0_5, %c0_6], %8 {strides = array<i32>} : memref<128x128xf32, #tpu.memory_space<vmem>>, vector<128x128xf32>,
    return
  }
  func.func @transform_0(%arg0: i32) -> (i32, i32, i32) {
    %c0_i32 = arith.constant 0 : i32
    %c0_i32_0 = arith.constant 0 : i32
    %c0_i32_1 = arith.constant 0 : i32
    return %arg0, %c0_i32, %c0_i32_0 : i32, i32, i32
  }
  func.func @transform_1(%arg0: i32) -> (i32, i32) {
    %c0_i32 = arith.constant 0 : i32
    %c0_i32_0 = arith.constant 0 : i32
    return %arg0, %c0_i32 : i32, i32
  }
  func.func @transform_2(%arg0: i32) -> (i32, i32) {
    %c0_i32 = arith.constant 0 : i32
    %c0_i32_0 = arith.constant 0 : i32
    return %arg0, %c0_i32 : i32, i32
  }
}

</mosaic_0001>

<llo_original>
// kernel: tpu_custom_call.1
$region0: #{tpu_custom_call.1}
  #allocation0 [shape = 'u32[]', space=smem, size = 0x4, offset = 0x4, fixed_abs, tag = 'smem constant byte address 0x4 - core index']
  #allocation1 [shape = 'u32[144,128]{1,0:T(1,128)}', space=vmem, size = 0x12000, scoped, tag = 'internal scratch']
  %s0 = inlined_call_operand.hbm [shape: f32[256,8,128], index: 0, kind: input, shape index: {}]
  %s1 = inlined_call_operand.vmem [shape: s32[256,1], index: 1, kind: input, shape index: {}]
  %s2 = inlined_call_operand.hbm [shape: f32[256,128], index: 2, kind: output, shape index: {}]
  %s3 = sld [smem:[#allocation0]]
  $region45: #{tpu_custom_call.1} parent=0
    _
  %s5 = ssub.s32 1, %s3
  %s6 = scalar_select 0, %s5, %s3
  $region1: #{tpu_custom_call.1} parent=0
    #allocation2 [shape = 'u8[1048576]{0}', space=vmem, size = 0x100000, scoped, tag = 'input window, operand 0']
    #allocation3 [shape = 's32[2]{0}', space=sflag, size = 0x8, scoped, tag = 'scoped memory for tpu_custom_call.1']
    #allocation4 [shape = 's32[2]{0}', space=sflag, size = 0x8, scoped, tag = 'scoped memory for tpu_custom_call.1']
    #allocation5 [shape = 'u8[131072]{0}', space=vmem, size = 0x20000, scoped, tag = 'output window, operand 0']
    %7 = vsyncpa [#allocation3], 0
    %s8 = scalar_lea.sflag [#allocation3], 1
    %9 = vsyncpa %s8, 0
    %10 = vsyncpa [#allocation4], 0
    %s11 = scalar_lea.sflag [#allocation4], 1
    %12 = vsyncpa %s11, 0
    loop: start=0, step=1, limit=4
    $region2: #{tpu_custom_call.1} parent=1 // loop_pre_header
      _
    $region3: #{tpu_custom_call.1} parent=1 // loop_header
      %s14 = sphi 0, %s18
      %p15 = scmp.ge.s32.totalorder %s14, 4
      %s24 = sphi 0, %s26
      %s27 = sphi 0, %s24
      %s28 = sphi 0, %s27
      %s44 = sphi 0, %s28
      %s50 = sphi 0, %s52
      %s53 = sphi 0, %s50
      %s54 = sphi 0, %s53
      %s70 = sphi 0, %s54
      %s76 = sphi 0, %s78
      %s79 = sphi 0, %s76
      %s80 = sphi 0, %s79
      %s96 = sphi 0, %s80
    $region4: #{tpu_custom_call.1} parent=1 // loop_header_branch
      %17 = sbr.rel (%p15) target = $region8
    $region5: #{tpu_custom_call.1} parent=1 // loop_body
      %s19 = ssub.s32 %s14, 1
      %s20 = ssub.s32 %s14, 2
      %s21 = sadd.s32 %s14, 1
      %s22 = ssub.s32 %s14, %s21
      %p23 = scmp.eq.s32.totalorder %s22, 0
      %s25 = sadd.s32 %s24, 1
      %s26 = scalar_select %p23, %s24, %s25
      %p29 = pneg %p23
      %p30 = scmp.eq.s32.totalorder %s14, 1
      %p31 = por %p29, %p30
      %p32 = scmp.ne.s32.totalorder %s24, %s27
      %p33 = scmp.eq.s32.totalorder %s14, 0
      %p34 = por %p32, %p33
      %p35 = scmp.ne.s32.totalorder %s24, %s27
      %p36 = scmp.eq.s32.totalorder %s19, 1
      %p37 = por %p35, %p36
      %p38 = scmp.ne.s32.totalorder %s27, %s28
      %p39 = scmp.eq.s32.totalorder %s19, 0
      %p40 = por %p38, %p39
      %p41 = scmp.ne.s32.totalorder %s27, %s28
      %p42 = scmp.eq.s32.totalorder %s20, 1
      %p43 = por %p41, %p42
      %p45 = scmp.ne.s32.totalorder %s28, %s44
      %p46 = scmp.eq.s32.totalorder %s20, 0
      %p47 = por %p45, %p46
      %s48 = ssub.s32 %s14, %s21
      %p49 = scmp.eq.s32.totalorder %s48, 0
      %s51 = sadd.s32 %s50, 1
      %s52 = scalar_select %p49, %s50, %s51
      %p55 = pneg %p49
      %p56 = scmp.eq.s32.totalorder %s14, 1
      %p57 = por %p55, %p56
      %p58 = scmp.ne.s32.totalorder %s50, %s53
      %p59 = scmp.eq.s32.totalorder %s14, 0
      %p60 = por %p58, %p59
      %p61 = scmp.ne.s32.totalorder %s50, %s53
      %p62 = scmp.eq.s32.totalorder %s19, 1
      %p63 = por %p61, %p62
      %p64 = scmp.ne.s32.totalorder %s53, %s54
      %p65 = scmp.eq.s32.totalorder %s19, 0
      %p66 = por %p64, %p65
      %p67 = scmp.ne.s32.totalorder %s53, %s54
      %p68 = scmp.eq.s32.totalorder %s20, 1
      %p69 = por %p67, %p68
      %p71 = scmp.ne.s32.totalorder %s54, %s70
      %p72 = scmp.eq.s32.totalorder %s20, 0
      %p73 = por %p71, %p72
      %s74 = ssub.s32 %s14, %s21
      %p75 = scmp.eq.s32.totalorder %s74, 0
      %s77 = sadd.s32 %s76, 1
      %s78 = scalar_select %p75, %s76, %s77
      %p81 = pneg %p75
      %p82 = scmp.eq.s32.totalorder %s14, 1
      %p83 = por %p81, %p82
      %p84 = scmp.ne.s32.totalorder %s76, %s79
      %p85 = scmp.eq.s32.totalorder %s14, 0
      %p86 = por %p84, %p85
      %p87 = scmp.ne.s32.totalorder %s76, %s79
      %p88 = scmp.eq.s32.totalorder %s19, 1
      %p89 = por %p87, %p88
      %p90 = scmp.ne.s32.totalorder %s79, %s80
      %p91 = scmp.eq.s32.totalorder %s19, 0
      %p92 = por %p90, %p91
      %p93 = scmp.ne.s32.totalorder %s79, %s80
      %p94 = scmp.eq.s32.totalorder %s20, 1
      %p95 = por %p93, %p94
      %p97 = scmp.ne.s32.totalorder %s80, %s96
      %p98 = scmp.eq.s32.totalorder %s20, 0
      %p99 = por %p97, %p98
      %p100 = scmp.le.s32.totalorder 1, %s14
      %p101 = scmp.lt.s32.totalorder %s14, 3
      %p102 = pnand %p100, %p101
      %p103 = pneg %p102
      // Predicated region
      $region9: #{tpu_custom_call.1} parent=5 // pred_check
        _
      $region10: #{tpu_custom_call.1} parent=5 // pred_check_branch
        %105 = sbr.rel (%p102) target = $region12
      $region11: #{tpu_custom_call.1} parent=5 // pred_region
        %s106 = ssub.s32 %s14, 1
      $region12: #{tpu_custom_call.1} parent=5 // pred_fallthru
        _
      %p107 = scmp.lt.s32.totalorder %s14, 2
      // Predicated region
      $region13: #{tpu_custom_call.1} parent=5 // pred_check
        %p108 = pneg %p107
      $region14: #{tpu_custom_call.1} parent=5 // pred_check_branch
        %110 = sbr.rel (%p108) target = $region16
      $region15: #{tpu_custom_call.1} parent=5 // pred_region
        // Predicated region
        $region17: #{tpu_custom_call.1} parent=15 // pred_check
          %p111 = pneg %p34
        $region18: #{tpu_custom_call.1} parent=15 // pred_check_branch
          %113 = sbr.rel (%p111) target = $region20
        $region19: #{tpu_custom_call.1} parent=15 // pred_region
          %s114 = sand.u32 %s24, 1
          %s115 = scalar_lea.sflag [#allocation3], %s114
          %s116 = sand.u32 %s24, 1
          %s117 = smul.addr %s116, 1024
          %s118 = scalar_lea.vmem [#allocation2], %s117
          %s119 = smul.u32 128, %s14
          %s121 = ssub.s32 16384, 16384
          %122 = vsyncadd %s115, %s121
          %s123 = smul.addr %s119, 128
          %s124 = scalar_lea.hbm %s0, %s123
          %s125 = sshll.u32 %s118, 4
          %s126 = int_to_ptr.vmem [resolvable:$true] %s125
          %131 = dma.hbm_to_vmem [thread:$0]  %s124, 16384, %s126, %s115, 128, 128, 8
        $region20: #{tpu_custom_call.1} parent=15 // pred_fallthru
          _
        // Predicated region
        $region21: #{tpu_custom_call.1} parent=15 // pred_check
          %p132 = pneg %p60
        $region22: #{tpu_custom_call.1} parent=15 // pred_check_branch
          %134 = sbr.rel (%p132) target = $region24
        $region23: #{tpu_custom_call.1} parent=15 // pred_region
          %s135 = smul.u32 16, %s14
          %p136 = scmp.lt.s32.totalorder %s135, 31
          %s137 = scalar_select %p136, %s135, 31
          %s138 = smul.addr %s137, 8
          %s139 = scalar_lea.vmem %s1, %s138
          %s140 = smul.u32 16, %s14
        $region24: #{tpu_custom_call.1} parent=15 // pred_fallthru
          _
      $region16: #{tpu_custom_call.1} parent=5 // pred_fallthru
        _
      %p141 = scmp.le.s32.totalorder 1, %s14
      %p142 = scmp.lt.s32.totalorder %s14, 3
      %p143 = pnand %p141, %p142
      %p144 = pneg %p143
      // Predicated region
      $region25: #{tpu_custom_call.1} parent=5 // pred_check
        _
      $region26: #{tpu_custom_call.1} parent=5 // pred_check_branch
        %146 = sbr.rel (%p143) target = $region28
      $region27: #{tpu_custom_call.1} parent=5 // pred_region
        %s147 = ssub.s32 %s14, 1
        %s148 = sand.u32 %s27, 1
        %s149 = scalar_lea.sflag [#allocation3], %s148
        %s150 = sand.u32 %s27, 1
        %s151 = smul.addr %s150, 1024
        %s152 = scalar_lea.vmem [#allocation2], %s151
        // Predicated region
        $region29: #{tpu_custom_call.1} parent=27 // pred_check
          %p153 = pneg %p40
        $region30: #{tpu_custom_call.1} parent=27 // pred_check_branch
          %155 = sbr.rel (%p153) target = $region32
        $region31: #{tpu_custom_call.1} parent=27 // pred_region
          %156 = dma.done %s149, 16384
        $region32: #{tpu_custom_call.1} parent=27 // pred_fallthru
          _
        %s157 = sand.u32 %s27, 1
        %s158 = scalar_lea.sflag [#allocation3], %s157
        %s159 = sand.u32 %s27, 1
        %s160 = smul.addr %s159, 1024
        %s161 = scalar_lea.vmem [#allocation2], %s160
        %p162 = pneg %p40
        %p163 = pneg %p37
        %s164 = smul.u32 16, %s19
        %p165 = scmp.lt.s32.totalorder %s164, 31
        %s166 = scalar_select %p165, %s164, 31
        %s167 = smul.addr %s166, 8
        %s168 = scalar_lea.vmem %s1, %s167
        %p169 = pneg %p66
        %p170 = pneg %p63
        %p171 = pneg %p92
        %p172 = pneg %p89
        %s173 = sand.u32 %s79, 1
        %s174 = scalar_lea.sflag [#allocation4], %s173
        %s175 = sand.u32 %s79, 1
        %s176 = smul.addr %s175, 128
        %s177 = scalar_lea.vmem [#allocation5], %s176
        %s178 = smul.u32 128, %s19
        %s179 = smul.u32 16, %s19
        %p180 = scmp.lt.s32.totalorder %s179, 31
        %s181 = scalar_select %p180, %s179, 31
        %s182 = smul.addr %s181, 8
        %s183 = scalar_lea.vmem %s1, %s182
        %s184 = smul.u32 16, %s19
        %s185 = smul.u32 16, %s19
        %v186 = vld [vmem:[%s152] sm:$0xff]
        %v187 = vld [vmem:[%s152 + $0x8] sm:$0xff]
        %v188 = vld [vmem:[%s152 + $0x10] sm:$0xff]
        %v189 = vld [vmem:[%s152 + $0x18] sm:$0xff]
        %v190 = vld [vmem:[%s152 + $0x20] sm:$0xff]
        %v191 = vld [vmem:[%s152 + $0x28] sm:$0xff]
        %v192 = vld [vmem:[%s152 + $0x30] sm:$0xff]
        %v193 = vld [vmem:[%s152 + $0x38] sm:$0xff]
        %v194 = vld [vmem:[%s152 + $0x40] sm:$0xff]
        %v195 = vld [vmem:[%s152 + $0x48] sm:$0xff]
        %v196 = vld [vmem:[%s152 + $0x50] sm:$0xff]
        %v197 = vld [vmem:[%s152 + $0x58] sm:$0xff]
        %v198 = vld [vmem:[%s152 + $0x60] sm:$0xff]
        %v199 = vld [vmem:[%s152 + $0x68] sm:$0xff]
        %v200 = vld [vmem:[%s152 + $0x70] sm:$0xff]
        %v201 = vld [vmem:[%s152 + $0x78] sm:$0xff]
        %v202 = vld [vmem:[%s152 + $0x80] sm:$0xff]
        %v203 = vld [vmem:[%s152 + $0x88] sm:$0xff]
        %v204 = vld [vmem:[%s152 + $0x90] sm:$0xff]
        %v205 = vld [vmem:[%s152 + $0x98] sm:$0xff]
        %v206 = vld [vmem:[%s152 + $0xa0] sm:$0xff]
        %v207 = vld [vmem:[%s152 + $0xa8] sm:$0xff]
        %v208 = vld [vmem:[%s152 + $0xb0] sm:$0xff]
        %v209 = vld [vmem:[%s152 + $0xb8] sm:$0xff]
        %v210 = vld [vmem:[%s152 + $0xc0] sm:$0xff]
        %v211 = vld [vmem:[%s152 + $0xc8] sm:$0xff]
        %v212 = vld [vmem:[%s152 + $0xd0] sm:$0xff]
        %v213 = vld [vmem:[%s152 + $0xd8] sm:$0xff]
        %v214 = vld [vmem:[%s152 + $0xe0] sm:$0xff]
        %v215 = vld [vmem:[%s152 + $0xe8] sm:$0xff]
        %v216 = vld [vmem:[%s152 + $0xf0] sm:$0xff]
        %v217 = vld [vmem:[%s152 + $0xf8] sm:$0xff]
        %v218 = vld [vmem:[%s152 + $0x100] sm:$0xff]
        %v219 = vld [vmem:[%s152 + $0x108] sm:$0xff]
        %v220 = vld [vmem:[%s152 + $0x110] sm:$0xff]
        %v221 = vld [vmem:[%s152 + $0x118] sm:$0xff]
        %v222 = vld [vmem:[%s152 + $0x120] sm:$0xff]
        %v223 = vld [vmem:[%s152 + $0x128] sm:$0xff]
        %v224 = vld [vmem:[%s152 + $0x130] sm:$0xff]
        %v225 = vld [vmem:[%s152 + $0x138] sm:$0xff]
        %v226 = vld [vmem:[%s152 + $0x140] sm:$0xff]
        %v227 = vld [vmem:[%s152 + $0x148] sm:$0xff]
        %v228 = vld [vmem:[%s152 + $0x150] sm:$0xff]
        %v229 = vld [vmem:[%s152 + $0x158] sm:$0xff]
        %v230 = vld [vmem:[%s152 + $0x160] sm:$0xff]
        %v231 = vld [vmem:[%s152 + $0x168] sm:$0xff]
        %v232 = vld [vmem:[%s152 + $0x170] sm:$0xff]
        %v233 = vld [vmem:[%s152 + $0x178] sm:$0xff]
        %v234 = vld [vmem:[%s152 + $0x180] sm:$0xff]
        %v235 = vld [vmem:[%s152 + $0x188] sm:$0xff]
        %v236 = vld [vmem:[%s152 + $0x190] sm:$0xff]
        %v237 = vld [vmem:[%s152 + $0x198] sm:$0xff]
        %v238 = vld [vmem:[%s152 + $0x1a0] sm:$0xff]
        %v239 = vld [vmem:[%s152 + $0x1a8] sm:$0xff]
        %v240 = vld [vmem:[%s152 + $0x1b0] sm:$0xff]
        %v241 = vld [vmem:[%s152 + $0x1b8] sm:$0xff]
        %v242 = vld [vmem:[%s152 + $0x1c0] sm:$0xff]
        %v243 = vld [vmem:[%s152 + $0x1c8] sm:$0xff]
        %v244 = vld [vmem:[%s152 + $0x1d0] sm:$0xff]
        %v245 = vld [vmem:[%s152 + $0x1d8] sm:$0xff]
        %v246 = vld [vmem:[%s152 + $0x1e0] sm:$0xff]
        %v247 = vld [vmem:[%s152 + $0x1e8] sm:$0xff]
        %v248 = vld [vmem:[%s152 + $0x1f0] sm:$0xff]
        %v249 = vld [vmem:[%s152 + $0x1f8] sm:$0xff]
        %v250 = vld [vmem:[%s152 + $0x200] sm:$0xff]
        %v251 = vld [vmem:[%s152 + $0x208] sm:$0xff]
        %v252 = vld [vmem:[%s152 + $0x210] sm:$0xff]
        %v253 = vld [vmem:[%s152 + $0x218] sm:$0xff]
        %v254 = vld [vmem:[%s152 + $0x220] sm:$0xff]
        %v255 = vld [vmem:[%s152 + $0x228] sm:$0xff]
        %v256 = vld [vmem:[%s152 + $0x230] sm:$0xff]
        %v257 = vld [vmem:[%s152 + $0x238] sm:$0xff]
        %v258 = vld [vmem:[%s152 + $0x240] sm:$0xff]
        %v259 = vld [vmem:[%s152 + $0x248] sm:$0xff]
        %v260 = vld [vmem:[%s152 + $0x250] sm:$0xff]
        %v261 = vld [vmem:[%s152 + $0x258] sm:$0xff]
        %v262 = vld [vmem:[%s152 + $0x260] sm:$0xff]
        %v263 = vld [vmem:[%s152 + $0x268] sm:$0xff]
        %v264 = vld [vmem:[%s152 + $0x270] sm:$0xff]
        %v265 = vld [vmem:[%s152 + $0x278] sm:$0xff]
        %v266 = vld [vmem:[%s152 + $0x280] sm:$0xff]
        %v267 = vld [vmem:[%s152 + $0x288] sm:$0xff]
        %v268 = vld [vmem:[%s152 + $0x290] sm:$0xff]
        %v269 = vld [vmem:[%s152 + $0x298] sm:$0xff]
        %v270 = vld [vmem:[%s152 + $0x2a0] sm:$0xff]
        %v271 = vld [vmem:[%s152 + $0x2a8] sm:$0xff]
        %v272 = vld [vmem:[%s152 + $0x2b0] sm:$0xff]
        %v273 = vld [vmem:[%s152 + $0x2b8] sm:$0xff]
        %v274 = vld [vmem:[%s152 + $0x2c0] sm:$0xff]
        %v275 = vld [vmem:[%s152 + $0x2c8] sm:$0xff]
        %v276 = vld [vmem:[%s152 + $0x2d0] sm:$0xff]
        %v277 = vld [vmem:[%s152 + $0x2d8] sm:$0xff]
        %v278 = vld [vmem:[%s152 + $0x2e0] sm:$0xff]
        %v279 = vld [vmem:[%s152 + $0x2e8] sm:$0xff]
        %v280 = vld [vmem:[%s152 + $0x2f0] sm:$0xff]
        %v281 = vld [vmem:[%s152 + $0x2f8] sm:$0xff]
        %v282 = vld [vmem:[%s152 + $0x300] sm:$0xff]
        %v283 = vld [vmem:[%s152 + $0x308] sm:$0xff]
        %v284 = vld [vmem:[%s152 + $0x310] sm:$0xff]
        %v285 = vld [vmem:[%s152 + $0x318] sm:$0xff]
        %v286 = vld [vmem:[%s152 + $0x320] sm:$0xff]
        %v287 = vld [vmem:[%s152 + $0x328] sm:$0xff]
        %v288 = vld [vmem:[%s152 + $0x330] sm:$0xff]
        %v289 = vld [vmem:[%s152 + $0x338] sm:$0xff]
        %v290 = vld [vmem:[%s152 + $0x340] sm:$0xff]
        %v291 = vld [vmem:[%s152 + $0x348] sm:$0xff]
        %v292 = vld [vmem:[%s152 + $0x350] sm:$0xff]
        %v293 = vld [vmem:[%s152 + $0x358] sm:$0xff]
        %v294 = vld [vmem:[%s152 + $0x360] sm:$0xff]
        %v295 = vld [vmem:[%s152 + $0x368] sm:$0xff]
        %v296 = vld [vmem:[%s152 + $0x370] sm:$0xff]
        %v297 = vld [vmem:[%s152 + $0x378] sm:$0xff]
        %v298 = vld [vmem:[%s152 + $0x380] sm:$0xff]
        %v299 = vld [vmem:[%s152 + $0x388] sm:$0xff]
        %v300 = vld [vmem:[%s152 + $0x390] sm:$0xff]
        %v301 = vld [vmem:[%s152 + $0x398] sm:$0xff]
        %v302 = vld [vmem:[%s152 + $0x3a0] sm:$0xff]
        %v303 = vld [vmem:[%s152 + $0x3a8] sm:$0xff]
        %v304 = vld [vmem:[%s152 + $0x3b0] sm:$0xff]
        %v305 = vld [vmem:[%s152 + $0x3b8] sm:$0xff]
        %v306 = vld [vmem:[%s152 + $0x3c0] sm:$0xff]
        %v307 = vld [vmem:[%s152 + $0x3c8] sm:$0xff]
        %v308 = vld [vmem:[%s152 + $0x3d0] sm:$0xff]
        %v309 = vld [vmem:[%s152 + $0x3d8] sm:$0xff]
        %v310 = vld [vmem:[%s152 + $0x3e0] sm:$0xff]
        %v311 = vld [vmem:[%s152 + $0x3e8] sm:$0xff]
        %v312 = vld [vmem:[%s152 + $0x3f0] sm:$0xff]
        %v313 = vld [vmem:[%s152 + $0x3f8] sm:$0xff]
        %v314 = vrot.slane %v186, 4
        %v315 = vadd.f32 %v186, %v314
        %v316 = vrot.slane %v315, 2
        %v317 = vadd.f32 %v315, %v316
        %v318 = vrot.slane %v317, 1
        %v319 = vadd.f32 %v317, %v318
        %v320 = vrot.slane %v187, 4
        %v321 = vadd.f32 %v187, %v320
        %v322 = vrot.slane %v321, 2
        %v323 = vadd.f32 %v321, %v322
        %v324 = vrot.slane %v323, 1
        %v325 = vadd.f32 %v323, %v324
        %v326 = vrot.slane %v188, 4
        %v327 = vadd.f32 %v188, %v326
        %v328 = vrot.slane %v327, 2
        %v329 = vadd.f32 %v327, %v328
        %v330 = vrot.slane %v329, 1
        %v331 = vadd.f32 %v329, %v330
        %v332 = vrot.slane %v189, 4
        %v333 = vadd.f32 %v189, %v332
        %v334 = vrot.slane %v333, 2
        %v335 = vadd.f32 %v333, %v334
        %v336 = vrot.slane %v335, 1
        %v337 = vadd.f32 %v335, %v336
        %v338 = vrot.slane %v190, 4
        %v339 = vadd.f32 %v190, %v338
        %v340 = vrot.slane %v339, 2
        %v341 = vadd.f32 %v339, %v340
        %v342 = vrot.slane %v341, 1
        %v343 = vadd.f32 %v341, %v342
        %v344 = vrot.slane %v191, 4
        %v345 = vadd.f32 %v191, %v344
        %v346 = vrot.slane %v345, 2
        %v347 = vadd.f32 %v345, %v346
        %v348 = vrot.slane %v347, 1
        %v349 = vadd.f32 %v347, %v348
        %v350 = vrot.slane %v192, 4
        %v351 = vadd.f32 %v192, %v350
        %v352 = vrot.slane %v351, 2
        %v353 = vadd.f32 %v351, %v352
        %v354 = vrot.slane %v353, 1
        %v355 = vadd.f32 %v353, %v354
        %v356 = vrot.slane %v193, 4
        %v357 = vadd.f32 %v193, %v356
        %v358 = vrot.slane %v357, 2
        %v359 = vadd.f32 %v357, %v358
        %v360 = vrot.slane %v359, 1
        %v361 = vadd.f32 %v359, %v360
        %v362 = vrot.slane %v194, 4
        %v363 = vadd.f32 %v194, %v362
        %v364 = vrot.slane %v363, 2
        %v365 = vadd.f32 %v363, %v364
        %v366 = vrot.slane %v365, 1
        %v367 = vadd.f32 %v365, %v366
        %v368 = vrot.slane %v195, 4
        %v369 = vadd.f32 %v195, %v368
        %v370 = vrot.slane %v369, 2
        %v371 = vadd.f32 %v369, %v370
        %v372 = vrot.slane %v371, 1
        %v373 = vadd.f32 %v371, %v372
        %v374 = vrot.slane %v196, 4
        %v375 = vadd.f32 %v196, %v374
        %v376 = vrot.slane %v375, 2
        %v377 = vadd.f32 %v375, %v376
        %v378 = vrot.slane %v377, 1
        %v379 = vadd.f32 %v377, %v378
        %v380 = vrot.slane %v197, 4
        %v381 = vadd.f32 %v197, %v380
        %v382 = vrot.slane %v381, 2
        %v383 = vadd.f32 %v381, %v382
        %v384 = vrot.slane %v383, 1
        %v385 = vadd.f32 %v383, %v384
        %v386 = vrot.slane %v198, 4
        %v387 = vadd.f32 %v198, %v386
        %v388 = vrot.slane %v387, 2
        %v389 = vadd.f32 %v387, %v388
        %v390 = vrot.slane %v389, 1
        %v391 = vadd.f32 %v389, %v390
        %v392 = vrot.slane %v199, 4
        %v393 = vadd.f32 %v199, %v392
        %v394 = vrot.slane %v393, 2
        %v395 = vadd.f32 %v393, %v394
        %v396 = vrot.slane %v395, 1
        %v397 = vadd.f32 %v395, %v396
        %v398 = vrot.slane %v200, 4
        %v399 = vadd.f32 %v200, %v398
        %v400 = vrot.slane %v399, 2
        %v401 = vadd.f32 %v399, %v400
        %v402 = vrot.slane %v401, 1
        %v403 = vadd.f32 %v401, %v402
        %v404 = vrot.slane %v201, 4
        %v405 = vadd.f32 %v201, %v404
        %v406 = vrot.slane %v405, 2
        %v407 = vadd.f32 %v405, %v406
        %v408 = vrot.slane %v407, 1
        %v409 = vadd.f32 %v407, %v408
        %v410 = vrot.slane %v202, 4
        %v411 = vadd.f32 %v202, %v410
        %v412 = vrot.slane %v411, 2
        %v413 = vadd.f32 %v411, %v412
        %v414 = vrot.slane %v413, 1
        %v415 = vadd.f32 %v413, %v414
        %v416 = vrot.slane %v203, 4
        %v417 = vadd.f32 %v203, %v416
        %v418 = vrot.slane %v417, 2
        %v419 = vadd.f32 %v417, %v418
        %v420 = vrot.slane %v419, 1
        %v421 = vadd.f32 %v419, %v420
        %v422 = vrot.slane %v204, 4
        %v423 = vadd.f32 %v204, %v422
        %v424 = vrot.slane %v423, 2
        %v425 = vadd.f32 %v423, %v424
        %v426 = vrot.slane %v425, 1
        %v427 = vadd.f32 %v425, %v426
        %v428 = vrot.slane %v205, 4
        %v429 = vadd.f32 %v205, %v428
        %v430 = vrot.slane %v429, 2
        %v431 = vadd.f32 %v429, %v430
        %v432 = vrot.slane %v431, 1
        %v433 = vadd.f32 %v431, %v432
        %v434 = vrot.slane %v206, 4
        %v435 = vadd.f32 %v206, %v434
        %v436 = vrot.slane %v435, 2
        %v437 = vadd.f32 %v435, %v436
        %v438 = vrot.slane %v437, 1
        %v439 = vadd.f32 %v437, %v438
        %v440 = vrot.slane %v207, 4
        %v441 = vadd.f32 %v207, %v440
        %v442 = vrot.slane %v441, 2
        %v443 = vadd.f32 %v441, %v442
        %v444 = vrot.slane %v443, 1
        %v445 = vadd.f32 %v443, %v444
        %v446 = vrot.slane %v208, 4
        %v447 = vadd.f32 %v208, %v446
        %v448 = vrot.slane %v447, 2
        %v449 = vadd.f32 %v447, %v448
        %v450 = vrot.slane %v449, 1
        %v451 = vadd.f32 %v449, %v450
        %v452 = vrot.slane %v209, 4
        %v453 = vadd.f32 %v209, %v452
        %v454 = vrot.slane %v453, 2
        %v455 = vadd.f32 %v453, %v454
        %v456 = vrot.slane %v455, 1
        %v457 = vadd.f32 %v455, %v456
        %v458 = vrot.slane %v210, 4
        %v459 = vadd.f32 %v210, %v458
        %v460 = vrot.slane %v459, 2
        %v461 = vadd.f32 %v459, %v460
        %v462 = vrot.slane %v461, 1
        %v463 = vadd.f32 %v461, %v462
        %v464 = vrot.slane %v211, 4
        %v465 = vadd.f32 %v211, %v464
        %v466 = vrot.slane %v465, 2
        %v467 = vadd.f32 %v465, %v466
        %v468 = vrot.slane %v467, 1
        %v469 = vadd.f32 %v467, %v468
        %v470 = vrot.slane %v212, 4
        %v471 = vadd.f32 %v212, %v470
        %v472 = vrot.slane %v471, 2
        %v473 = vadd.f32 %v471, %v472
        %v474 = vrot.slane %v473, 1
        %v475 = vadd.f32 %v473, %v474
        %v476 = vrot.slane %v213, 4
        %v477 = vadd.f32 %v213, %v476
        %v478 = vrot.slane %v477, 2
        %v479 = vadd.f32 %v477, %v478
        %v480 = vrot.slane %v479, 1
        %v481 = vadd.f32 %v479, %v480
        %v482 = vrot.slane %v214, 4
        %v483 = vadd.f32 %v214, %v482
        %v484 = vrot.slane %v483, 2
        %v485 = vadd.f32 %v483, %v484
        %v486 = vrot.slane %v485, 1
        %v487 = vadd.f32 %v485, %v486
        %v488 = vrot.slane %v215, 4
        %v489 = vadd.f32 %v215, %v488
        %v490 = vrot.slane %v489, 2
        %v491 = vadd.f32 %v489, %v490
        %v492 = vrot.slane %v491, 1
        %v493 = vadd.f32 %v491, %v492
        %v494 = vrot.slane %v216, 4
        %v495 = vadd.f32 %v216, %v494
        %v496 = vrot.slane %v495, 2
        %v497 = vadd.f32 %v495, %v496
        %v498 = vrot.slane %v497, 1
        %v499 = vadd.f32 %v497, %v498
        %v500 = vrot.slane %v217, 4
        %v501 = vadd.f32 %v217, %v500
        %v502 = vrot.slane %v501, 2
        %v503 = vadd.f32 %v501, %v502
        %v504 = vrot.slane %v503, 1
        %v505 = vadd.f32 %v503, %v504
        %v506 = vrot.slane %v218, 4
        %v507 = vadd.f32 %v218, %v506
        %v508 = vrot.slane %v507, 2
        %v509 = vadd.f32 %v507, %v508
        %v510 = vrot.slane %v509, 1
        %v511 = vadd.f32 %v509, %v510
        %v512 = vrot.slane %v219, 4
        %v513 = vadd.f32 %v219, %v512
        %v514 = vrot.slane %v513, 2
        %v515 = vadd.f32 %v513, %v514
        %v516 = vrot.slane %v515, 1
        %v517 = vadd.f32 %v515, %v516
        %v518 = vrot.slane %v220, 4
        %v519 = vadd.f32 %v220, %v518
        %v520 = vrot.slane %v519, 2
        %v521 = vadd.f32 %v519, %v520
        %v522 = vrot.slane %v521, 1
        %v523 = vadd.f32 %v521, %v522
        %v524 = vrot.slane %v221, 4
        %v525 = vadd.f32 %v221, %v524
        %v526 = vrot.slane %v525, 2
        %v527 = vadd.f32 %v525, %v526
        %v528 = vrot.slane %v527, 1
        %v529 = vadd.f32 %v527, %v528
        %v530 = vrot.slane %v222, 4
        %v531 = vadd.f32 %v222, %v530
        %v532 = vrot.slane %v531, 2
        %v533 = vadd.f32 %v531, %v532
        %v534 = vrot.slane %v533, 1
        %v535 = vadd.f32 %v533, %v534
        %v536 = vrot.slane %v223, 4
        %v537 = vadd.f32 %v223, %v536
        %v538 = vrot.slane %v537, 2
        %v539 = vadd.f32 %v537, %v538
        %v540 = vrot.slane %v539, 1
        %v541 = vadd.f32 %v539, %v540
        %v542 = vrot.slane %v224, 4
        %v543 = vadd.f32 %v224, %v542
        %v544 = vrot.slane %v543, 2
        %v545 = vadd.f32 %v543, %v544
        %v546 = vrot.slane %v545, 1
        %v547 = vadd.f32 %v545, %v546
        %v548 = vrot.slane %v225, 4
        %v549 = vadd.f32 %v225, %v548
        %v550 = vrot.slane %v549, 2
        %v551 = vadd.f32 %v549, %v550
        %v552 = vrot.slane %v551, 1
        %v553 = vadd.f32 %v551, %v552
        %v554 = vrot.slane %v226, 4
        %v555 = vadd.f32 %v226, %v554
        %v556 = vrot.slane %v555, 2
        %v557 = vadd.f32 %v555, %v556
        %v558 = vrot.slane %v557, 1
        %v559 = vadd.f32 %v557, %v558
        %v560 = vrot.slane %v227, 4
        %v561 = vadd.f32 %v227, %v560
        %v562 = vrot.slane %v561, 2
        %v563 = vadd.f32 %v561, %v562
        %v564 = vrot.slane %v563, 1
        %v565 = vadd.f32 %v563, %v564
        %v566 = vrot.slane %v228, 4
        %v567 = vadd.f32 %v228, %v566
        %v568 = vrot.slane %v567, 2
        %v569 = vadd.f32 %v567, %v568
        %v570 = vrot.slane %v569, 1
        %v571 = vadd.f32 %v569, %v570
        %v572 = vrot.slane %v229, 4
        %v573 = vadd.f32 %v229, %v572
        %v574 = vrot.slane %v573, 2
        %v575 = vadd.f32 %v573, %v574
        %v576 = vrot.slane %v575, 1
        %v577 = vadd.f32 %v575, %v576
        %v578 = vrot.slane %v230, 4
        %v579 = vadd.f32 %v230, %v578
        %v580 = vrot.slane %v579, 2
        %v581 = vadd.f32 %v579, %v580
        %v582 = vrot.slane %v581, 1
        %v583 = vadd.f32 %v581, %v582
        %v584 = vrot.slane %v231, 4
        %v585 = vadd.f32 %v231, %v584
        %v586 = vrot.slane %v585, 2
        %v587 = vadd.f32 %v585, %v586
        %v588 = vrot.slane %v587, 1
        %v589 = vadd.f32 %v587, %v588
        %v590 = vrot.slane %v232, 4
        %v591 = vadd.f32 %v232, %v590
        %v592 = vrot.slane %v591, 2
        %v593 = vadd.f32 %v591, %v592
        %v594 = vrot.slane %v593, 1
        %v595 = vadd.f32 %v593, %v594
        %v596 = vrot.slane %v233, 4
        %v597 = vadd.f32 %v233, %v596
        %v598 = vrot.slane %v597, 2
        %v599 = vadd.f32 %v597, %v598
        %v600 = vrot.slane %v599, 1
        %v601 = vadd.f32 %v599, %v600
        %v602 = vrot.slane %v234, 4
        %v603 = vadd.f32 %v234, %v602
        %v604 = vrot.slane %v603, 2
        %v605 = vadd.f32 %v603, %v604
        %v606 = vrot.slane %v605, 1
        %v607 = vadd.f32 %v605, %v606
        %v608 = vrot.slane %v235, 4
        %v609 = vadd.f32 %v235, %v608
        %v610 = vrot.slane %v609, 2
        %v611 = vadd.f32 %v609, %v610
        %v612 = vrot.slane %v611, 1
        %v613 = vadd.f32 %v611, %v612
        %v614 = vrot.slane %v236, 4
        %v615 = vadd.f32 %v236, %v614
        %v616 = vrot.slane %v615, 2
        %v617 = vadd.f32 %v615, %v616
        %v618 = vrot.slane %v617, 1
        %v619 = vadd.f32 %v617, %v618
        %v620 = vrot.slane %v237, 4
        %v621 = vadd.f32 %v237, %v620
        %v622 = vrot.slane %v621, 2
        %v623 = vadd.f32 %v621, %v622
        %v624 = vrot.slane %v623, 1
        %v625 = vadd.f32 %v623, %v624
        %v626 = vrot.slane %v238, 4
        %v627 = vadd.f32 %v238, %v626
        %v628 = vrot.slane %v627, 2
        %v629 = vadd.f32 %v627, %v628
        %v630 = vrot.slane %v629, 1
        %v631 = vadd.f32 %v629, %v630
        %v632 = vrot.slane %v239, 4
        %v633 = vadd.f32 %v239, %v632
        %v634 = vrot.slane %v633, 2
        %v635 = vadd.f32 %v633, %v634
        %v636 = vrot.slane %v635, 1
        %v637 = vadd.f32 %v635, %v636
        %v638 = vrot.slane %v240, 4
        %v639 = vadd.f32 %v240, %v638
        %v640 = vrot.slane %v639, 2
        %v641 = vadd.f32 %v639, %v640
        %v642 = vrot.slane %v641, 1
        %v643 = vadd.f32 %v641, %v642
        %v644 = vrot.slane %v241, 4
        %v645 = vadd.f32 %v241, %v644
        %v646 = vrot.slane %v645, 2
        %v647 = vadd.f32 %v645, %v646
        %v648 = vrot.slane %v647, 1
        %v649 = vadd.f32 %v647, %v648
        %v650 = vrot.slane %v242, 4
        %v651 = vadd.f32 %v242, %v650
        %v652 = vrot.slane %v651, 2
        %v653 = vadd.f32 %v651, %v652
        %v654 = vrot.slane %v653, 1
        %v655 = vadd.f32 %v653, %v654
        %v656 = vrot.slane %v243, 4
        %v657 = vadd.f32 %v243, %v656
        %v658 = vrot.slane %v657, 2
        %v659 = vadd.f32 %v657, %v658
        %v660 = vrot.slane %v659, 1
        %v661 = vadd.f32 %v659, %v660
        %v662 = vrot.slane %v244, 4
        %v663 = vadd.f32 %v244, %v662
        %v664 = vrot.slane %v663, 2
        %v665 = vadd.f32 %v663, %v664
        %v666 = vrot.slane %v665, 1
        %v667 = vadd.f32 %v665, %v666
        %v668 = vrot.slane %v245, 4
        %v669 = vadd.f32 %v245, %v668
        %v670 = vrot.slane %v669, 2
        %v671 = vadd.f32 %v669, %v670
        %v672 = vrot.slane %v671, 1
        %v673 = vadd.f32 %v671, %v672
        %v674 = vrot.slane %v246, 4
        %v675 = vadd.f32 %v246, %v674
        %v676 = vrot.slane %v675, 2
        %v677 = vadd.f32 %v675, %v676
        %v678 = vrot.slane %v677, 1
        %v679 = vadd.f32 %v677, %v678
        %v680 = vrot.slane %v247, 4
        %v681 = vadd.f32 %v247, %v680
        %v682 = vrot.slane %v681, 2
        %v683 = vadd.f32 %v681, %v682
        %v684 = vrot.slane %v683, 1
        %v685 = vadd.f32 %v683, %v684
        %v686 = vrot.slane %v248, 4
        %v687 = vadd.f32 %v248, %v686
        %v688 = vrot.slane %v687, 2
        %v689 = vadd.f32 %v687, %v688
        %v690 = vrot.slane %v689, 1
        %v691 = vadd.f32 %v689, %v690
        %v692 = vrot.slane %v249, 4
        %v693 = vadd.f32 %v249, %v692
        %v694 = vrot.slane %v693, 2
        %v695 = vadd.f32 %v693, %v694
        %v696 = vrot.slane %v695, 1
        %v697 = vadd.f32 %v695, %v696
        %v698 = vrot.slane %v250, 4
        %v699 = vadd.f32 %v250, %v698
        %v700 = vrot.slane %v699, 2
        %v701 = vadd.f32 %v699, %v700
        %v702 = vrot.slane %v701, 1
        %v703 = vadd.f32 %v701, %v702
        %v704 = vrot.slane %v251, 4
        %v705 = vadd.f32 %v251, %v704
        %v706 = vrot.slane %v705, 2
        %v707 = vadd.f32 %v705, %v706
        %v708 = vrot.slane %v707, 1
        %v709 = vadd.f32 %v707, %v708
        %v710 = vrot.slane %v252, 4
        %v711 = vadd.f32 %v252, %v710
        %v712 = vrot.slane %v711, 2
        %v713 = vadd.f32 %v711, %v712
        %v714 = vrot.slane %v713, 1
        %v715 = vadd.f32 %v713, %v714
        %v716 = vrot.slane %v253, 4
        %v717 = vadd.f32 %v253, %v716
        %v718 = vrot.slane %v717, 2
        %v719 = vadd.f32 %v717, %v718
        %v720 = vrot.slane %v719, 1
        %v721 = vadd.f32 %v719, %v720
        %v722 = vrot.slane %v254, 4
        %v723 = vadd.f32 %v254, %v722
        %v724 = vrot.slane %v723, 2
        %v725 = vadd.f32 %v723, %v724
        %v726 = vrot.slane %v725, 1
        %v727 = vadd.f32 %v725, %v726
        %v728 = vrot.slane %v255, 4
        %v729 = vadd.f32 %v255, %v728
        %v730 = vrot.slane %v729, 2
        %v731 = vadd.f32 %v729, %v730
        %v732 = vrot.slane %v731, 1
        %v733 = vadd.f32 %v731, %v732
        %v734 = vrot.slane %v256, 4
        %v735 = vadd.f32 %v256, %v734
        %v736 = vrot.slane %v735, 2
        %v737 = vadd.f32 %v735, %v736
        %v738 = vrot.slane %v737, 1
        %v739 = vadd.f32 %v737, %v738
        %v740 = vrot.slane %v257, 4
        %v741 = vadd.f32 %v257, %v740
        %v742 = vrot.slane %v741, 2
        %v743 = vadd.f32 %v741, %v742
        %v744 = vrot.slane %v743, 1
        %v745 = vadd.f32 %v743, %v744
        %v746 = vrot.slane %v258, 4
        %v747 = vadd.f32 %v258, %v746
        %v748 = vrot.slane %v747, 2
        %v749 = vadd.f32 %v747, %v748
        %v750 = vrot.slane %v749, 1
        %v751 = vadd.f32 %v749, %v750
        %v752 = vrot.slane %v259, 4
        %v753 = vadd.f32 %v259, %v752
        %v754 = vrot.slane %v753, 2
        %v755 = vadd.f32 %v753, %v754
        %v756 = vrot.slane %v755, 1
        %v757 = vadd.f32 %v755, %v756
        %v758 = vrot.slane %v260, 4
        %v759 = vadd.f32 %v260, %v758
        %v760 = vrot.slane %v759, 2
        %v761 = vadd.f32 %v759, %v760
        %v762 = vrot.slane %v761, 1
        %v763 = vadd.f32 %v761, %v762
        %v764 = vrot.slane %v261, 4
        %v765 = vadd.f32 %v261, %v764
        %v766 = vrot.slane %v765, 2
        %v767 = vadd.f32 %v765, %v766
        %v768 = vrot.slane %v767, 1
        %v769 = vadd.f32 %v767, %v768
        %v770 = vrot.slane %v262, 4
        %v771 = vadd.f32 %v262, %v770
        %v772 = vrot.slane %v771, 2
        %v773 = vadd.f32 %v771, %v772
        %v774 = vrot.slane %v773, 1
        %v775 = vadd.f32 %v773, %v774
        %v776 = vrot.slane %v263, 4
        %v777 = vadd.f32 %v263, %v776
        %v778 = vrot.slane %v777, 2
        %v779 = vadd.f32 %v777, %v778
        %v780 = vrot.slane %v779, 1
        %v781 = vadd.f32 %v779, %v780
        %v782 = vrot.slane %v264, 4
        %v783 = vadd.f32 %v264, %v782
        %v784 = vrot.slane %v783, 2
        %v785 = vadd.f32 %v783, %v784
        %v786 = vrot.slane %v785, 1
        %v787 = vadd.f32 %v785, %v786
        %v788 = vrot.slane %v265, 4
        %v789 = vadd.f32 %v265, %v788
        %v790 = vrot.slane %v789, 2
        %v791 = vadd.f32 %v789, %v790
        %v792 = vrot.slane %v791, 1
        %v793 = vadd.f32 %v791, %v792
        %v794 = vrot.slane %v266, 4
        %v795 = vadd.f32 %v266, %v794
        %v796 = vrot.slane %v795, 2
        %v797 = vadd.f32 %v795, %v796
        %v798 = vrot.slane %v797, 1
        %v799 = vadd.f32 %v797, %v798
        %v800 = vrot.slane %v267, 4
        %v801 = vadd.f32 %v267, %v800
        %v802 = vrot.slane %v801, 2
        %v803 = vadd.f32 %v801, %v802
        %v804 = vrot.slane %v803, 1
        %v805 = vadd.f32 %v803, %v804
        %v806 = vrot.slane %v268, 4
        %v807 = vadd.f32 %v268, %v806
        %v808 = vrot.slane %v807, 2
        %v809 = vadd.f32 %v807, %v808
        %v810 = vrot.slane %v809, 1
        %v811 = vadd.f32 %v809, %v810
        %v812 = vrot.slane %v269, 4
        %v813 = vadd.f32 %v269, %v812
        %v814 = vrot.slane %v813, 2
        %v815 = vadd.f32 %v813, %v814
        %v816 = vrot.slane %v815, 1
        %v817 = vadd.f32 %v815, %v816
        %v818 = vrot.slane %v270, 4
        %v819 = vadd.f32 %v270, %v818
        %v820 = vrot.slane %v819, 2
        %v821 = vadd.f32 %v819, %v820
        %v822 = vrot.slane %v821, 1
        %v823 = vadd.f32 %v821, %v822
        %v824 = vrot.slane %v271, 4
        %v825 = vadd.f32 %v271, %v824
        %v826 = vrot.slane %v825, 2
        %v827 = vadd.f32 %v825, %v826
        %v828 = vrot.slane %v827, 1
        %v829 = vadd.f32 %v827, %v828
        %v830 = vrot.slane %v272, 4
        %v831 = vadd.f32 %v272, %v830
        %v832 = vrot.slane %v831, 2
        %v833 = vadd.f32 %v831, %v832
        %v834 = vrot.slane %v833, 1
        %v835 = vadd.f32 %v833, %v834
        %v836 = vrot.slane %v273, 4
        %v837 = vadd.f32 %v273, %v836
        %v838 = vrot.slane %v837, 2
        %v839 = vadd.f32 %v837, %v838
        %v840 = vrot.slane %v839, 1
        %v841 = vadd.f32 %v839, %v840
        %v842 = vrot.slane %v274, 4
        %v843 = vadd.f32 %v274, %v842
        %v844 = vrot.slane %v843, 2
        %v845 = vadd.f32 %v843, %v844
        %v846 = vrot.slane %v845, 1
        %v847 = vadd.f32 %v845, %v846
        %v848 = vrot.slane %v275, 4
        %v849 = vadd.f32 %v275, %v848
        %v850 = vrot.slane %v849, 2
        %v851 = vadd.f32 %v849, %v850
        %v852 = vrot.slane %v851, 1
        %v853 = vadd.f32 %v851, %v852
        %v854 = vrot.slane %v276, 4
        %v855 = vadd.f32 %v276, %v854
        %v856 = vrot.slane %v855, 2
        %v857 = vadd.f32 %v855, %v856
        %v858 = vrot.slane %v857, 1
        %v859 = vadd.f32 %v857, %v858
        %v860 = vrot.slane %v277, 4
        %v861 = vadd.f32 %v277, %v860
        %v862 = vrot.slane %v861, 2
        %v863 = vadd.f32 %v861, %v862
        %v864 = vrot.slane %v863, 1
        %v865 = vadd.f32 %v863, %v864
        %v866 = vrot.slane %v278, 4
        %v867 = vadd.f32 %v278, %v866
        %v868 = vrot.slane %v867, 2
        %v869 = vadd.f32 %v867, %v868
        %v870 = vrot.slane %v869, 1
        %v871 = vadd.f32 %v869, %v870
        %v872 = vrot.slane %v279, 4
        %v873 = vadd.f32 %v279, %v872
        %v874 = vrot.slane %v873, 2
        %v875 = vadd.f32 %v873, %v874
        %v876 = vrot.slane %v875, 1
        %v877 = vadd.f32 %v875, %v876
        %v878 = vrot.slane %v280, 4
        %v879 = vadd.f32 %v280, %v878
        %v880 = vrot.slane %v879, 2
        %v881 = vadd.f32 %v879, %v880
        %v882 = vrot.slane %v881, 1
        %v883 = vadd.f32 %v881, %v882
        %v884 = vrot.slane %v281, 4
        %v885 = vadd.f32 %v281, %v884
        %v886 = vrot.slane %v885, 2
        %v887 = vadd.f32 %v885, %v886
        %v888 = vrot.slane %v887, 1
        %v889 = vadd.f32 %v887, %v888
        %v890 = vrot.slane %v282, 4
        %v891 = vadd.f32 %v282, %v890
        %v892 = vrot.slane %v891, 2
        %v893 = vadd.f32 %v891, %v892
        %v894 = vrot.slane %v893, 1
        %v895 = vadd.f32 %v893, %v894
        %v896 = vrot.slane %v283, 4
        %v897 = vadd.f32 %v283, %v896
        %v898 = vrot.slane %v897, 2
        %v899 = vadd.f32 %v897, %v898
        %v900 = vrot.slane %v899, 1
        %v901 = vadd.f32 %v899, %v900
        %v902 = vrot.slane %v284, 4
        %v903 = vadd.f32 %v284, %v902
        %v904 = vrot.slane %v903, 2
        %v905 = vadd.f32 %v903, %v904
        %v906 = vrot.slane %v905, 1
        %v907 = vadd.f32 %v905, %v906
        %v908 = vrot.slane %v285, 4
        %v909 = vadd.f32 %v285, %v908
        %v910 = vrot.slane %v909, 2
        %v911 = vadd.f32 %v909, %v910
        %v912 = vrot.slane %v911, 1
        %v913 = vadd.f32 %v911, %v912
        %v914 = vrot.slane %v286, 4
        %v915 = vadd.f32 %v286, %v914
        %v916 = vrot.slane %v915, 2
        %v917 = vadd.f32 %v915, %v916
        %v918 = vrot.slane %v917, 1
        %v919 = vadd.f32 %v917, %v918
        %v920 = vrot.slane %v287, 4
        %v921 = vadd.f32 %v287, %v920
        %v922 = vrot.slane %v921, 2
        %v923 = vadd.f32 %v921, %v922
        %v924 = vrot.slane %v923, 1
        %v925 = vadd.f32 %v923, %v924
        %v926 = vrot.slane %v288, 4
        %v927 = vadd.f32 %v288, %v926
        %v928 = vrot.slane %v927, 2
        %v929 = vadd.f32 %v927, %v928
        %v930 = vrot.slane %v929, 1
        %v931 = vadd.f32 %v929, %v930
        %v932 = vrot.slane %v289, 4
        %v933 = vadd.f32 %v289, %v932
        %v934 = vrot.slane %v933, 2
        %v935 = vadd.f32 %v933, %v934
        %v936 = vrot.slane %v935, 1
        %v937 = vadd.f32 %v935, %v936
        %v938 = vrot.slane %v290, 4
        %v939 = vadd.f32 %v290, %v938
        %v940 = vrot.slane %v939, 2
        %v941 = vadd.f32 %v939, %v940
        %v942 = vrot.slane %v941, 1
        %v943 = vadd.f32 %v941, %v942
        %v944 = vrot.slane %v291, 4
        %v945 = vadd.f32 %v291, %v944
        %v946 = vrot.slane %v945, 2
        %v947 = vadd.f32 %v945, %v946
        %v948 = vrot.slane %v947, 1
        %v949 = vadd.f32 %v947, %v948
        %v950 = vrot.slane %v292, 4
        %v951 = vadd.f32 %v292, %v950
        %v952 = vrot.slane %v951, 2
        %v953 = vadd.f32 %v951, %v952
        %v954 = vrot.slane %v953, 1
        %v955 = vadd.f32 %v953, %v954
        %v956 = vrot.slane %v293, 4
        %v957 = vadd.f32 %v293, %v956
        %v958 = vrot.slane %v957, 2
        %v959 = vadd.f32 %v957, %v958
        %v960 = vrot.slane %v959, 1
        %v961 = vadd.f32 %v959, %v960
        %v962 = vrot.slane %v294, 4
        %v963 = vadd.f32 %v294, %v962
        %v964 = vrot.slane %v963, 2
        %v965 = vadd.f32 %v963, %v964
        %v966 = vrot.slane %v965, 1
        %v967 = vadd.f32 %v965, %v966
        %v968 = vrot.slane %v295, 4
        %v969 = vadd.f32 %v295, %v968
        %v970 = vrot.slane %v969, 2
        %v971 = vadd.f32 %v969, %v970
        %v972 = vrot.slane %v971, 1
        %v973 = vadd.f32 %v971, %v972
        %v974 = vrot.slane %v296, 4
        %v975 = vadd.f32 %v296, %v974
        %v976 = vrot.slane %v975, 2
        %v977 = vadd.f32 %v975, %v976
        %v978 = vrot.slane %v977, 1
        %v979 = vadd.f32 %v977, %v978
        %v980 = vrot.slane %v297, 4
        %v981 = vadd.f32 %v297, %v980
        %v982 = vrot.slane %v981, 2
        %v983 = vadd.f32 %v981, %v982
        %v984 = vrot.slane %v983, 1
        %v985 = vadd.f32 %v983, %v984
        %v986 = vrot.slane %v298, 4
        %v987 = vadd.f32 %v298, %v986
        %v988 = vrot.slane %v987, 2
        %v989 = vadd.f32 %v987, %v988
        %v990 = vrot.slane %v989, 1
        %v991 = vadd.f32 %v989, %v990
        %v992 = vrot.slane %v299, 4
        %v993 = vadd.f32 %v299, %v992
        %v994 = vrot.slane %v993, 2
        %v995 = vadd.f32 %v993, %v994
        %v996 = vrot.slane %v995, 1
        %v997 = vadd.f32 %v995, %v996
        %v998 = vrot.slane %v300, 4
        %v999 = vadd.f32 %v300, %v998
        %v1000 = vrot.slane %v999, 2
        %v1001 = vadd.f32 %v999, %v1000
        %v1002 = vrot.slane %v1001, 1
        %v1003 = vadd.f32 %v1001, %v1002
        %v1004 = vrot.slane %v301, 4
        %v1005 = vadd.f32 %v301, %v1004
        %v1006 = vrot.slane %v1005, 2
        %v1007 = vadd.f32 %v1005, %v1006
        %v1008 = vrot.slane %v1007, 1
        %v1009 = vadd.f32 %v1007, %v1008
        %v1010 = vrot.slane %v302, 4
        %v1011 = vadd.f32 %v302, %v1010
        %v1012 = vrot.slane %v1011, 2
        %v1013 = vadd.f32 %v1011, %v1012
        %v1014 = vrot.slane %v1013, 1
        %v1015 = vadd.f32 %v1013, %v1014
        %v1016 = vrot.slane %v303, 4
        %v1017 = vadd.f32 %v303, %v1016
        %v1018 = vrot.slane %v1017, 2
        %v1019 = vadd.f32 %v1017, %v1018
        %v1020 = vrot.slane %v1019, 1
        %v1021 = vadd.f32 %v1019, %v1020
        %v1022 = vrot.slane %v304, 4
        %v1023 = vadd.f32 %v304, %v1022
        %v1024 = vrot.slane %v1023, 2
        %v1025 = vadd.f32 %v1023, %v1024
        %v1026 = vrot.slane %v1025, 1
        %v1027 = vadd.f32 %v1025, %v1026
        %v1028 = vrot.slane %v305, 4
        %v1029 = vadd.f32 %v305, %v1028
        %v1030 = vrot.slane %v1029, 2
        %v1031 = vadd.f32 %v1029, %v1030
        %v1032 = vrot.slane %v1031, 1
        %v1033 = vadd.f32 %v1031, %v1032
        %v1034 = vrot.slane %v306, 4
        %v1035 = vadd.f32 %v306, %v1034
        %v1036 = vrot.slane %v1035, 2
        %v1037 = vadd.f32 %v1035, %v1036
        %v1038 = vrot.slane %v1037, 1
        %v1039 = vadd.f32 %v1037, %v1038
        %v1040 = vrot.slane %v307, 4
        %v1041 = vadd.f32 %v307, %v1040
        %v1042 = vrot.slane %v1041, 2
        %v1043 = vadd.f32 %v1041, %v1042
        %v1044 = vrot.slane %v1043, 1
        %v1045 = vadd.f32 %v1043, %v1044
        %v1046 = vrot.slane %v308, 4
        %v1047 = vadd.f32 %v308, %v1046
        %v1048 = vrot.slane %v1047, 2
        %v1049 = vadd.f32 %v1047, %v1048
        %v1050 = vrot.slane %v1049, 1
        %v1051 = vadd.f32 %v1049, %v1050
        %v1052 = vrot.slane %v309, 4
        %v1053 = vadd.f32 %v309, %v1052
        %v1054 = vrot.slane %v1053, 2
        %v1055 = vadd.f32 %v1053, %v1054
        %v1056 = vrot.slane %v1055, 1
        %v1057 = vadd.f32 %v1055, %v1056
        %v1058 = vrot.slane %v310, 4
        %v1059 = vadd.f32 %v310, %v1058
        %v1060 = vrot.slane %v1059, 2
        %v1061 = vadd.f32 %v1059, %v1060
        %v1062 = vrot.slane %v1061, 1
        %v1063 = vadd.f32 %v1061, %v1062
        %v1064 = vrot.slane %v311, 4
        %v1065 = vadd.f32 %v311, %v1064
        %v1066 = vrot.slane %v1065, 2
        %v1067 = vadd.f32 %v1065, %v1066
        %v1068 = vrot.slane %v1067, 1
        %v1069 = vadd.f32 %v1067, %v1068
        %v1070 = vrot.slane %v312, 4
        %v1071 = vadd.f32 %v312, %v1070
        %v1072 = vrot.slane %v1071, 2
        %v1073 = vadd.f32 %v1071, %v1072
        %v1074 = vrot.slane %v1073, 1
        %v1075 = vadd.f32 %v1073, %v1074
        %v1076 = vrot.slane %v313, 4
        %v1077 = vadd.f32 %v313, %v1076
        %v1078 = vrot.slane %v1077, 2
        %v1079 = vadd.f32 %v1077, %v1078
        %v1080 = vrot.slane %v1079, 1
        %v1081 = vadd.f32 %v1079, %v1080
        %v1082 = vld [vmem:[%s183] sm:$0xff]
        %v1083 = vld [vmem:[%s183 + $0x8] sm:$0xff]
        %v1084 = vld [vmem:[%s183 + $0x10] sm:$0xff]
        %v1085 = vld [vmem:[%s183 + $0x18] sm:$0xff]
        %v1086 = vld [vmem:[%s183 + $0x20] sm:$0xff]
        %v1087 = vld [vmem:[%s183 + $0x28] sm:$0xff]
        %v1088 = vld [vmem:[%s183 + $0x30] sm:$0xff]
        %v1089 = vld [vmem:[%s183 + $0x38] sm:$0xff]
        %v1090 = vld [vmem:[%s183 + $0x40] sm:$0xff]
        %v1091 = vld [vmem:[%s183 + $0x48] sm:$0xff]
        %v1092 = vld [vmem:[%s183 + $0x50] sm:$0xff]
        %v1093 = vld [vmem:[%s183 + $0x58] sm:$0xff]
        %v1094 = vld [vmem:[%s183 + $0x60] sm:$0xff]
        %v1095 = vld [vmem:[%s183 + $0x68] sm:$0xff]
        %v1096 = vld [vmem:[%s183 + $0x70] sm:$0xff]
        %v1097 = vld [vmem:[%s183 + $0x78] sm:$0xff]
        %v1098 = vcvt.s32.f32 %v1082
        %v1099 = vcvt.s32.f32 %v1083
        %v1100 = vcvt.s32.f32 %v1084
        %v1101 = vcvt.s32.f32 %v1085
        %v1102 = vcvt.s32.f32 %v1086
        %v1103 = vcvt.s32.f32 %v1087
        %v1104 = vcvt.s32.f32 %v1088
        %v1105 = vcvt.s32.f32 %v1089
        %v1106 = vcvt.s32.f32 %v1090
        %v1107 = vcvt.s32.f32 %v1091
        %v1108 = vcvt.s32.f32 %v1092
        %v1109 = vcvt.s32.f32 %v1093
        %v1110 = vcvt.s32.f32 %v1094
        %v1111 = vcvt.s32.f32 %v1095
        %v1112 = vcvt.s32.f32 %v1096
        %v1113 = vcvt.s32.f32 %v1097
        %v1114 = vmax.f32 %v1098, 1.0
        %v1115 = vmax.f32 %v1099, 1.0
        %v1116 = vmax.f32 %v1100, 1.0
        %v1117 = vmax.f32 %v1101, 1.0
        %v1118 = vmax.f32 %v1102, 1.0
        %v1119 = vmax.f32 %v1103, 1.0
        %v1120 = vmax.f32 %v1104, 1.0
        %v1121 = vmax.f32 %v1105, 1.0
        %v1122 = vmax.f32 %v1106, 1.0
        %v1123 = vmax.f32 %v1107, 1.0
        %v1124 = vmax.f32 %v1108, 1.0
        %v1125 = vmax.f32 %v1109, 1.0
        %v1126 = vmax.f32 %v1110, 1.0
        %v1127 = vmax.f32 %v1111, 1.0
        %v1128 = vmax.f32 %v1112, 1.0
        %v1129 = vmax.f32 %v1113, 1.0
        %v1130 = vrcp.pop %v1114
        %v1131 = vrcp.pop %v1115
        %v1132 = vrcp.pop %v1116
        %v1133 = vrcp.pop %v1117
        %v1134 = vrcp.pop %v1118
        %v1135 = vrcp.pop %v1119
        %v1136 = vrcp.pop %v1120
        %v1137 = vrcp.pop %v1121
        %v1138 = vrcp.pop %v1122
        %v1139 = vrcp.pop %v1123
        %v1140 = vrcp.pop %v1124
        %v1141 = vrcp.pop %v1125
        %v1142 = vrcp.pop %v1126
        %v1143 = vrcp.pop %v1127
        %v1144 = vrcp.pop %v1128
        %v1145 = vrcp.pop %v1129
        %1147 = vset.pattern.permute.xlu0 0
        %1148 = vperm.xlu0 %1147, %v1130
        %v1149 = vpop.permute.xlu0 %1148
        %1151 = vset.pattern.permute.xlu0 0
        %1152 = vperm.xlu0 %1151, %v1131
        %v1153 = vpop.permute.xlu0 %1152
        %1155 = vset.pattern.permute.xlu0 0
        %1156 = vperm.xlu0 %1155, %v1132
        %v1157 = vpop.permute.xlu0 %1156
        %1159 = vset.pattern.permute.xlu0 0
        %1160 = vperm.xlu0 %1159, %v1133
        %v1161 = vpop.permute.xlu0 %1160
        %1163 = vset.pattern.permute.xlu0 0
        %1164 = vperm.xlu0 %1163, %v1134
        %v1165 = vpop.permute.xlu0 %1164
        %1167 = vset.pattern.permute.xlu0 0
        %1168 = vperm.xlu0 %1167, %v1135
        %v1169 = vpop.permute.xlu0 %1168
        %1171 = vset.pattern.permute.xlu0 0
        %1172 = vperm.xlu0 %1171, %v1136
        %v1173 = vpop.permute.xlu0 %1172
        %1175 = vset.pattern.permute.xlu0 0
        %1176 = vperm.xlu0 %1175, %v1137
        %v1177 = vpop.permute.xlu0 %1176
        %1179 = vset.pattern.permute.xlu0 0
        %1180 = vperm.xlu0 %1179, %v1138
        %v1181 = vpop.permute.xlu0 %1180
        %1183 = vset.pattern.permute.xlu0 0
        %1184 = vperm.xlu0 %1183, %v1139
        %v1185 = vpop.permute.xlu0 %1184
        %1187 = vset.pattern.permute.xlu0 0
        %1188 = vperm.xlu0 %1187, %v1140
        %v1189 = vpop.permute.xlu0 %1188
        %1191 = vset.pattern.permute.xlu0 0
        %1192 = vperm.xlu0 %1191, %v1141
        %v1193 = vpop.permute.xlu0 %1192
        %1195 = vset.pattern.permute.xlu0 0
        %1196 = vperm.xlu0 %1195, %v1142
        %v1197 = vpop.permute.xlu0 %1196
        %1199 = vset.pattern.permute.xlu0 0
        %1200 = vperm.xlu0 %1199, %v1143
        %v1201 = vpop.permute.xlu0 %1200
        %1203 = vset.pattern.permute.xlu0 0
        %1204 = vperm.xlu0 %1203, %v1144
        %v1205 = vpop.permute.xlu0 %1204
        %1207 = vset.pattern.permute.xlu0 0
        %1208 = vperm.xlu0 %1207, %v1145
        %v1209 = vpop.permute.xlu0 %1208
        %v1210 = vrot.slane %v1149, 1
        %v1211 = vrot.slane %v1149, 2
        %v1212 = vrot.slane %v1149, 3
        %v1213 = vrot.slane %v1149, 4
        %v1214 = vrot.slane %v1149, 5
        %v1215 = vrot.slane %v1149, 6
        %v1216 = vrot.slane %v1149, 7
        %v1217 = vrot.slane %v1153, 1
        %v1218 = vrot.slane %v1153, 2
        %v1219 = vrot.slane %v1153, 3
        %v1220 = vrot.slane %v1153, 4
        %v1221 = vrot.slane %v1153, 5
        %v1222 = vrot.slane %v1153, 6
        %v1223 = vrot.slane %v1153, 7
        %v1224 = vrot.slane %v1157, 1
        %v1225 = vrot.slane %v1157, 2
        %v1226 = vrot.slane %v1157, 3
        %v1227 = vrot.slane %v1157, 4
        %v1228 = vrot.slane %v1157, 5
        %v1229 = vrot.slane %v1157, 6
        %v1230 = vrot.slane %v1157, 7
        %v1231 = vrot.slane %v1161, 1
        %v1232 = vrot.slane %v1161, 2
        %v1233 = vrot.slane %v1161, 3
        %v1234 = vrot.slane %v1161, 4
        %v1235 = vrot.slane %v1161, 5
        %v1236 = vrot.slane %v1161, 6
        %v1237 = vrot.slane %v1161, 7
        %v1238 = vrot.slane %v1165, 1
        %v1239 = vrot.slane %v1165, 2
        %v1240 = vrot.slane %v1165, 3
        %v1241 = vrot.slane %v1165, 4
        %v1242 = vrot.slane %v1165, 5
        %v1243 = vrot.slane %v1165, 6
        %v1244 = vrot.slane %v1165, 7
        %v1245 = vrot.slane %v1169, 1
        %v1246 = vrot.slane %v1169, 2
        %v1247 = vrot.slane %v1169, 3
        %v1248 = vrot.slane %v1169, 4
        %v1249 = vrot.slane %v1169, 5
        %v1250 = vrot.slane %v1169, 6
        %v1251 = vrot.slane %v1169, 7
        %v1252 = vrot.slane %v1173, 1
        %v1253 = vrot.slane %v1173, 2
        %v1254 = vrot.slane %v1173, 3
        %v1255 = vrot.slane %v1173, 4
        %v1256 = vrot.slane %v1173, 5
        %v1257 = vrot.slane %v1173, 6
        %v1258 = vrot.slane %v1173, 7
        %v1259 = vrot.slane %v1177, 1
        %v1260 = vrot.slane %v1177, 2
        %v1261 = vrot.slane %v1177, 3
        %v1262 = vrot.slane %v1177, 4
        %v1263 = vrot.slane %v1177, 5
        %v1264 = vrot.slane %v1177, 6
        %v1265 = vrot.slane %v1177, 7
        %v1266 = vrot.slane %v1181, 1
        %v1267 = vrot.slane %v1181, 2
        %v1268 = vrot.slane %v1181, 3
        %v1269 = vrot.slane %v1181, 4
        %v1270 = vrot.slane %v1181, 5
        %v1271 = vrot.slane %v1181, 6
        %v1272 = vrot.slane %v1181, 7
        %v1273 = vrot.slane %v1185, 1
        %v1274 = vrot.slane %v1185, 2
        %v1275 = vrot.slane %v1185, 3
        %v1276 = vrot.slane %v1185, 4
        %v1277 = vrot.slane %v1185, 5
        %v1278 = vrot.slane %v1185, 6
        %v1279 = vrot.slane %v1185, 7
        %v1280 = vrot.slane %v1189, 1
        %v1281 = vrot.slane %v1189, 2
        %v1282 = vrot.slane %v1189, 3
        %v1283 = vrot.slane %v1189, 4
        %v1284 = vrot.slane %v1189, 5
        %v1285 = vrot.slane %v1189, 6
        %v1286 = vrot.slane %v1189, 7
        %v1287 = vrot.slane %v1193, 1
        %v1288 = vrot.slane %v1193, 2
        %v1289 = vrot.slane %v1193, 3
        %v1290 = vrot.slane %v1193, 4
        %v1291 = vrot.slane %v1193, 5
        %v1292 = vrot.slane %v1193, 6
        %v1293 = vrot.slane %v1193, 7
        %v1294 = vrot.slane %v1197, 1
        %v1295 = vrot.slane %v1197, 2
        %v1296 = vrot.slane %v1197, 3
        %v1297 = vrot.slane %v1197, 4
        %v1298 = vrot.slane %v1197, 5
        %v1299 = vrot.slane %v1197, 6
        %v1300 = vrot.slane %v1197, 7
        %v1301 = vrot.slane %v1201, 1
        %v1302 = vrot.slane %v1201, 2
        %v1303 = vrot.slane %v1201, 3
        %v1304 = vrot.slane %v1201, 4
        %v1305 = vrot.slane %v1201, 5
        %v1306 = vrot.slane %v1201, 6
        %v1307 = vrot.slane %v1201, 7
        %v1308 = vrot.slane %v1205, 1
        %v1309 = vrot.slane %v1205, 2
        %v1310 = vrot.slane %v1205, 3
        %v1311 = vrot.slane %v1205, 4
        %v1312 = vrot.slane %v1205, 5
        %v1313 = vrot.slane %v1205, 6
        %v1314 = vrot.slane %v1205, 7
        %v1315 = vrot.slane %v1209, 1
        %v1316 = vrot.slane %v1209, 2
        %v1317 = vrot.slane %v1209, 3
        %v1318 = vrot.slane %v1209, 4
        %v1319 = vrot.slane %v1209, 5
        %v1320 = vrot.slane %v1209, 6
        %v1321 = vrot.slane %v1209, 7
        %v1450 = vmul.f32 %v319, %v1149
        %v1451 = vmul.f32 %v325, %v1210
        %v1452 = vmul.f32 %v331, %v1211
        %v1453 = vmul.f32 %v337, %v1212
        %v1454 = vmul.f32 %v343, %v1213
        %v1455 = vmul.f32 %v349, %v1214
        %v1456 = vmul.f32 %v355, %v1215
        %v1457 = vmul.f32 %v361, %v1216
        %v1458 = vmul.f32 %v367, %v1153
        %v1459 = vmul.f32 %v373, %v1217
        %v1460 = vmul.f32 %v379, %v1218
        %v1461 = vmul.f32 %v385, %v1219
        %v1462 = vmul.f32 %v391, %v1220
        %v1463 = vmul.f32 %v397, %v1221
        %v1464 = vmul.f32 %v403, %v1222
        %v1465 = vmul.f32 %v409, %v1223
        %v1466 = vmul.f32 %v415, %v1157
        %v1467 = vmul.f32 %v421, %v1224
        %v1468 = vmul.f32 %v427, %v1225
        %v1469 = vmul.f32 %v433, %v1226
        %v1470 = vmul.f32 %v439, %v1227
        %v1471 = vmul.f32 %v445, %v1228
        %v1472 = vmul.f32 %v451, %v1229
        %v1473 = vmul.f32 %v457, %v1230
        %v1474 = vmul.f32 %v463, %v1161
        %v1475 = vmul.f32 %v469, %v1231
        %v1476 = vmul.f32 %v475, %v1232
        %v1477 = vmul.f32 %v481, %v1233
        %v1478 = vmul.f32 %v487, %v1234
        %v1479 = vmul.f32 %v493, %v1235
        %v1480 = vmul.f32 %v499, %v1236
        %v1481 = vmul.f32 %v505, %v1237
        %v1482 = vmul.f32 %v511, %v1165
        %v1483 = vmul.f32 %v517, %v1238
        %v1484 = vmul.f32 %v523, %v1239
        %v1485 = vmul.f32 %v529, %v1240
        %v1486 = vmul.f32 %v535, %v1241
        %v1487 = vmul.f32 %v541, %v1242
        %v1488 = vmul.f32 %v547, %v1243
        %v1489 = vmul.f32 %v553, %v1244
        %v1490 = vmul.f32 %v559, %v1169
        %v1491 = vmul.f32 %v565, %v1245
        %v1492 = vmul.f32 %v571, %v1246
        %v1493 = vmul.f32 %v577, %v1247
        %v1494 = vmul.f32 %v583, %v1248
        %v1495 = vmul.f32 %v589, %v1249
        %v1496 = vmul.f32 %v595, %v1250
        %v1497 = vmul.f32 %v601, %v1251
        %v1498 = vmul.f32 %v607, %v1173
        %v1499 = vmul.f32 %v613, %v1252
        %v1500 = vmul.f32 %v619, %v1253
        %v1501 = vmul.f32 %v625, %v1254
        %v1502 = vmul.f32 %v631, %v1255
        %v1503 = vmul.f32 %v637, %v1256
        %v1504 = vmul.f32 %v643, %v1257
        %v1505 = vmul.f32 %v649, %v1258
        %v1506 = vmul.f32 %v655, %v1177
        %v1507 = vmul.f32 %v661, %v1259
        %v1508 = vmul.f32 %v667, %v1260
        %v1509 = vmul.f32 %v673, %v1261
        %v1510 = vmul.f32 %v679, %v1262
        %v1511 = vmul.f32 %v685, %v1263
        %v1512 = vmul.f32 %v691, %v1264
        %v1513 = vmul.f32 %v697, %v1265
        %v1514 = vmul.f32 %v703, %v1181
        %v1515 = vmul.f32 %v709, %v1266
        %v1516 = vmul.f32 %v715, %v1267
        %v1517 = vmul.f32 %v721, %v1268
        %v1518 = vmul.f32 %v727, %v1269
        %v1519 = vmul.f32 %v733, %v1270
        %v1520 = vmul.f32 %v739, %v1271
        %v1521 = vmul.f32 %v745, %v1272
        %v1522 = vmul.f32 %v751, %v1185
        %v1523 = vmul.f32 %v757, %v1273
        %v1524 = vmul.f32 %v763, %v1274
        %v1525 = vmul.f32 %v769, %v1275
        %v1526 = vmul.f32 %v775, %v1276
        %v1527 = vmul.f32 %v781, %v1277
        %v1528 = vmul.f32 %v787, %v1278
        %v1529 = vmul.f32 %v793, %v1279
        %v1530 = vmul.f32 %v799, %v1189
        %v1531 = vmul.f32 %v805, %v1280
        %v1532 = vmul.f32 %v811, %v1281
        %v1533 = vmul.f32 %v817, %v1282
        %v1534 = vmul.f32 %v823, %v1283
        %v1535 = vmul.f32 %v829, %v1284
        %v1536 = vmul.f32 %v835, %v1285
        %v1537 = vmul.f32 %v841, %v1286
        %v1538 = vmul.f32 %v847, %v1193
        %v1539 = vmul.f32 %v853, %v1287
        %v1540 = vmul.f32 %v859, %v1288
        %v1541 = vmul.f32 %v865, %v1289
        %v1542 = vmul.f32 %v871, %v1290
        %v1543 = vmul.f32 %v877, %v1291
        %v1544 = vmul.f32 %v883, %v1292
        %v1545 = vmul.f32 %v889, %v1293
        %v1546 = vmul.f32 %v895, %v1197
        %v1547 = vmul.f32 %v901, %v1294
        %v1548 = vmul.f32 %v907, %v1295
        %v1549 = vmul.f32 %v913, %v1296
        %v1550 = vmul.f32 %v919, %v1297
        %v1551 = vmul.f32 %v925, %v1298
        %v1552 = vmul.f32 %v931, %v1299
        %v1553 = vmul.f32 %v937, %v1300
        %v1554 = vmul.f32 %v943, %v1201
        %v1555 = vmul.f32 %v949, %v1301
        %v1556 = vmul.f32 %v955, %v1302
        %v1557 = vmul.f32 %v961, %v1303
        %v1558 = vmul.f32 %v967, %v1304
        %v1559 = vmul.f32 %v973, %v1305
        %v1560 = vmul.f32 %v979, %v1306
        %v1561 = vmul.f32 %v985, %v1307
        %v1562 = vmul.f32 %v991, %v1205
        %v1563 = vmul.f32 %v997, %v1308
        %v1564 = vmul.f32 %v1003, %v1309
        %v1565 = vmul.f32 %v1009, %v1310
        %v1566 = vmul.f32 %v1015, %v1311
        %v1567 = vmul.f32 %v1021, %v1312
        %v1568 = vmul.f32 %v1027, %v1313
        %v1569 = vmul.f32 %v1033, %v1314
        %v1570 = vmul.f32 %v1039, %v1209
        %v1571 = vmul.f32 %v1045, %v1315
        %v1572 = vmul.f32 %v1051, %v1316
        %v1573 = vmul.f32 %v1057, %v1317
        %v1574 = vmul.f32 %v1063, %v1318
        %v1575 = vmul.f32 %v1069, %v1319
        %v1576 = vmul.f32 %v1075, %v1320
        %v1577 = vmul.f32 %v1081, %v1321
        %v1706 = vrot.slane %v1451, 7
        %vm1707 = vcmask 1041409
        %v1708 = vsel %vm1707, %v1706, %v1450
        %v1709 = vrot.slane %v1452, 6
        %vm1710 = vcmask 1042434
        %v1711 = vsel %vm1710, %v1709, %v1708
        %v1712 = vrot.slane %v1453, 5
        %vm1713 = vcmask 1043459
        %v1714 = vsel %vm1713, %v1712, %v1711
        %v1715 = vrot.slane %v1454, 4
        %vm1716 = vcmask 1044484
        %v1717 = vsel %vm1716, %v1715, %v1714
        %v1718 = vrot.slane %v1455, 3
        %vm1719 = vcmask 1045509
        %v1720 = vsel %vm1719, %v1718, %v1717
        %v1721 = vrot.slane %v1456, 2
        %vm1722 = vcmask 1046534
        %v1723 = vsel %vm1722, %v1721, %v1720
        %v1724 = vrot.slane %v1457, 1
        %vm1725 = vcmask 1047559
        %v1726 = vsel %vm1725, %v1724, %v1723
        %v1727 = vrot.slane %v1459, 7
        %v1728 = vsel %vm1707, %v1727, %v1458
        %v1729 = vrot.slane %v1460, 6
        %v1730 = vsel %vm1710, %v1729, %v1728
        %v1731 = vrot.slane %v1461, 5
        %v1732 = vsel %vm1713, %v1731, %v1730
        %v1733 = vrot.slane %v1462, 4
        %v1734 = vsel %vm1716, %v1733, %v1732
        %v1735 = vrot.slane %v1463, 3
        %v1736 = vsel %vm1719, %v1735, %v1734
        %v1737 = vrot.slane %v1464, 2
        %v1738 = vsel %vm1722, %v1737, %v1736
        %v1739 = vrot.slane %v1465, 1
        %v1740 = vsel %vm1725, %v1739, %v1738
        %v1741 = vrot.slane %v1467, 7
        %v1742 = vsel %vm1707, %v1741, %v1466
        %v1743 = vrot.slane %v1468, 6
        %v1744 = vsel %vm1710, %v1743, %v1742
        %v1745 = vrot.slane %v1469, 5
        %v1746 = vsel %vm1713, %v1745, %v1744
        %v1747 = vrot.slane %v1470, 4
        %v1748 = vsel %vm1716, %v1747, %v1746
        %v1749 = vrot.slane %v1471, 3
        %v1750 = vsel %vm1719, %v1749, %v1748
        %v1751 = vrot.slane %v1472, 2
        %v1752 = vsel %vm1722, %v1751, %v1750
        %v1753 = vrot.slane %v1473, 1
        %v1754 = vsel %vm1725, %v1753, %v1752
        %v1755 = vrot.slane %v1475, 7
        %v1756 = vsel %vm1707, %v1755, %v1474
        %v1757 = vrot.slane %v1476, 6
        %v1758 = vsel %vm1710, %v1757, %v1756
        %v1759 = vrot.slane %v1477, 5
        %v1760 = vsel %vm1713, %v1759, %v1758
        %v1761 = vrot.slane %v1478, 4
        %v1762 = vsel %vm1716, %v1761, %v1760
        %v1763 = vrot.slane %v1479, 3
        %v1764 = vsel %vm1719, %v1763, %v1762
        %v1765 = vrot.slane %v1480, 2
        %v1766 = vsel %vm1722, %v1765, %v1764
        %v1767 = vrot.slane %v1481, 1
        %v1768 = vsel %vm1725, %v1767, %v1766
        %v1769 = vrot.slane %v1483, 7
        %v1770 = vsel %vm1707, %v1769, %v1482
        %v1771 = vrot.slane %v1484, 6
        %v1772 = vsel %vm1710, %v1771, %v1770
        %v1773 = vrot.slane %v1485, 5
        %v1774 = vsel %vm1713, %v1773, %v1772
        %v1775 = vrot.slane %v1486, 4
        %v1776 = vsel %vm1716, %v1775, %v1774
        %v1777 = vrot.slane %v1487, 3
        %v1778 = vsel %vm1719, %v1777, %v1776
        %v1779 = vrot.slane %v1488, 2
        %v1780 = vsel %vm1722, %v1779, %v1778
        %v1781 = vrot.slane %v1489, 1
        %v1782 = vsel %vm1725, %v1781, %v1780
        %v1783 = vrot.slane %v1491, 7
        %v1784 = vsel %vm1707, %v1783, %v1490
        %v1785 = vrot.slane %v1492, 6
        %v1786 = vsel %vm1710, %v1785, %v1784
        %v1787 = vrot.slane %v1493, 5
        %v1788 = vsel %vm1713, %v1787, %v1786
        %v1789 = vrot.slane %v1494, 4
        %v1790 = vsel %vm1716, %v1789, %v1788
        %v1791 = vrot.slane %v1495, 3
        %v1792 = vsel %vm1719, %v1791, %v1790
        %v1793 = vrot.slane %v1496, 2
        %v1794 = vsel %vm1722, %v1793, %v1792
        %v1795 = vrot.slane %v1497, 1
        %v1796 = vsel %vm1725, %v1795, %v1794
        %v1797 = vrot.slane %v1499, 7
        %v1798 = vsel %vm1707, %v1797, %v1498
        %v1799 = vrot.slane %v1500, 6
        %v1800 = vsel %vm1710, %v1799, %v1798
        %v1801 = vrot.slane %v1501, 5
        %v1802 = vsel %vm1713, %v1801, %v1800
        %v1803 = vrot.slane %v1502, 4
        %v1804 = vsel %vm1716, %v1803, %v1802
        %v1805 = vrot.slane %v1503, 3
        %v1806 = vsel %vm1719, %v1805, %v1804
        %v1807 = vrot.slane %v1504, 2
        %v1808 = vsel %vm1722, %v1807, %v1806
        %v1809 = vrot.slane %v1505, 1
        %v1810 = vsel %vm1725, %v1809, %v1808
        %v1811 = vrot.slane %v1507, 7
        %v1812 = vsel %vm1707, %v1811, %v1506
        %v1813 = vrot.slane %v1508, 6
        %v1814 = vsel %vm1710, %v1813, %v1812
        %v1815 = vrot.slane %v1509, 5
        %v1816 = vsel %vm1713, %v1815, %v1814
        %v1817 = vrot.slane %v1510, 4
        %v1818 = vsel %vm1716, %v1817, %v1816
        %v1819 = vrot.slane %v1511, 3
        %v1820 = vsel %vm1719, %v1819, %v1818
        %v1821 = vrot.slane %v1512, 2
        %v1822 = vsel %vm1722, %v1821, %v1820
        %v1823 = vrot.slane %v1513, 1
        %v1824 = vsel %vm1725, %v1823, %v1822
        %v1825 = vrot.slane %v1515, 7
        %v1826 = vsel %vm1707, %v1825, %v1514
        %v1827 = vrot.slane %v1516, 6
        %v1828 = vsel %vm1710, %v1827, %v1826
        %v1829 = vrot.slane %v1517, 5
        %v1830 = vsel %vm1713, %v1829, %v1828
        %v1831 = vrot.slane %v1518, 4
        %v1832 = vsel %vm1716, %v1831, %v1830
        %v1833 = vrot.slane %v1519, 3
        %v1834 = vsel %vm1719, %v1833, %v1832
        %v1835 = vrot.slane %v1520, 2
        %v1836 = vsel %vm1722, %v1835, %v1834
        %v1837 = vrot.slane %v1521, 1
        %v1838 = vsel %vm1725, %v1837, %v1836
        %v1839 = vrot.slane %v1523, 7
        %v1840 = vsel %vm1707, %v1839, %v1522
        %v1841 = vrot.slane %v1524, 6
        %v1842 = vsel %vm1710, %v1841, %v1840
        %v1843 = vrot.slane %v1525, 5
        %v1844 = vsel %vm1713, %v1843, %v1842
        %v1845 = vrot.slane %v1526, 4
        %v1846 = vsel %vm1716, %v1845, %v1844
        %v1847 = vrot.slane %v1527, 3
        %v1848 = vsel %vm1719, %v1847, %v1846
        %v1849 = vrot.slane %v1528, 2
        %v1850 = vsel %vm1722, %v1849, %v1848
        %v1851 = vrot.slane %v1529, 1
        %v1852 = vsel %vm1725, %v1851, %v1850
        %v1853 = vrot.slane %v1531, 7
        %v1854 = vsel %vm1707, %v1853, %v1530
        %v1855 = vrot.slane %v1532, 6
        %v1856 = vsel %vm1710, %v1855, %v1854
        %v1857 = vrot.slane %v1533, 5
        %v1858 = vsel %vm1713, %v1857, %v1856
        %v1859 = vrot.slane %v1534, 4
        %v1860 = vsel %vm1716, %v1859, %v1858
        %v1861 = vrot.slane %v1535, 3
        %v1862 = vsel %vm1719, %v1861, %v1860
        %v1863 = vrot.slane %v1536, 2
        %v1864 = vsel %vm1722, %v1863, %v1862
        %v1865 = vrot.slane %v1537, 1
        %v1866 = vsel %vm1725, %v1865, %v1864
        %v1867 = vrot.slane %v1539, 7
        %v1868 = vsel %vm1707, %v1867, %v1538
        %v1869 = vrot.slane %v1540, 6
        %v1870 = vsel %vm1710, %v1869, %v1868
        %v1871 = vrot.slane %v1541, 5
        %v1872 = vsel %vm1713, %v1871, %v1870
        %v1873 = vrot.slane %v1542, 4
        %v1874 = vsel %vm1716, %v1873, %v1872
        %v1875 = vrot.slane %v1543, 3
        %v1876 = vsel %vm1719, %v1875, %v1874
        %v1877 = vrot.slane %v1544, 2
        %v1878 = vsel %vm1722, %v1877, %v1876
        %v1879 = vrot.slane %v1545, 1
        %v1880 = vsel %vm1725, %v1879, %v1878
        %v1881 = vrot.slane %v1547, 7
        %v1882 = vsel %vm1707, %v1881, %v1546
        %v1883 = vrot.slane %v1548, 6
        %v1884 = vsel %vm1710, %v1883, %v1882
        %v1885 = vrot.slane %v1549, 5
        %v1886 = vsel %vm1713, %v1885, %v1884
        %v1887 = vrot.slane %v1550, 4
        %v1888 = vsel %vm1716, %v1887, %v1886
        %v1889 = vrot.slane %v1551, 3
        %v1890 = vsel %vm1719, %v1889, %v1888
        %v1891 = vrot.slane %v1552, 2
        %v1892 = vsel %vm1722, %v1891, %v1890
        %v1893 = vrot.slane %v1553, 1
        %v1894 = vsel %vm1725, %v1893, %v1892
        %v1895 = vrot.slane %v1555, 7
        %v1896 = vsel %vm1707, %v1895, %v1554
        %v1897 = vrot.slane %v1556, 6
        %v1898 = vsel %vm1710, %v1897, %v1896
        %v1899 = vrot.slane %v1557, 5
        %v1900 = vsel %vm1713, %v1899, %v1898
        %v1901 = vrot.slane %v1558, 4
        %v1902 = vsel %vm1716, %v1901, %v1900
        %v1903 = vrot.slane %v1559, 3
        %v1904 = vsel %vm1719, %v1903, %v1902
        %v1905 = vrot.slane %v1560, 2
        %v1906 = vsel %vm1722, %v1905, %v1904
        %v1907 = vrot.slane %v1561, 1
        %v1908 = vsel %vm1725, %v1907, %v1906
        %v1909 = vrot.slane %v1563, 7
        %v1910 = vsel %vm1707, %v1909, %v1562
        %v1911 = vrot.slane %v1564, 6
        %v1912 = vsel %vm1710, %v1911, %v1910
        %v1913 = vrot.slane %v1565, 5
        %v1914 = vsel %vm1713, %v1913, %v1912
        %v1915 = vrot.slane %v1566, 4
        %v1916 = vsel %vm1716, %v1915, %v1914
        %v1917 = vrot.slane %v1567, 3
        %v1918 = vsel %vm1719, %v1917, %v1916
        %v1919 = vrot.slane %v1568, 2
        %v1920 = vsel %vm1722, %v1919, %v1918
        %v1921 = vrot.slane %v1569, 1
        %v1922 = vsel %vm1725, %v1921, %v1920
        %v1923 = vrot.slane %v1571, 7
        %v1924 = vsel %vm1707, %v1923, %v1570
        %v1925 = vrot.slane %v1572, 6
        %v1926 = vsel %vm1710, %v1925, %v1924
        %v1927 = vrot.slane %v1573, 5
        %v1928 = vsel %vm1713, %v1927, %v1926
        %v1929 = vrot.slane %v1574, 4
        %v1930 = vsel %vm1716, %v1929, %v1928
        %v1931 = vrot.slane %v1575, 3
        %v1932 = vsel %vm1719, %v1931, %v1930
        %v1933 = vrot.slane %v1576, 2
        %v1934 = vsel %vm1722, %v1933, %v1932
        %v1935 = vrot.slane %v1577, 1
        %v1936 = vsel %vm1725, %v1935, %v1934
        %1953 = vst [vmem:[%s177] sm:$0xff] %v1726
        %1954 = vst [vmem:[%s177 + $0x8] sm:$0xff] %v1740
        %1955 = vst [vmem:[%s177 + $0x10] sm:$0xff] %v1754
        %1956 = vst [vmem:[%s177 + $0x18] sm:$0xff] %v1768
        %1957 = vst [vmem:[%s177 + $0x20] sm:$0xff] %v1782
        %1958 = vst [vmem:[%s177 + $0x28] sm:$0xff] %v1796
        %1959 = vst [vmem:[%s177 + $0x30] sm:$0xff] %v1810
        %1960 = vst [vmem:[%s177 + $0x38] sm:$0xff] %v1824
        %1961 = vst [vmem:[%s177 + $0x40] sm:$0xff] %v1838
        %1962 = vst [vmem:[%s177 + $0x48] sm:$0xff] %v1852
        %1963 = vst [vmem:[%s177 + $0x50] sm:$0xff] %v1866
        %1964 = vst [vmem:[%s177 + $0x58] sm:$0xff] %v1880
        %1965 = vst [vmem:[%s177 + $0x60] sm:$0xff] %v1894
        %1966 = vst [vmem:[%s177 + $0x68] sm:$0xff] %v1908
        %1967 = vst [vmem:[%s177 + $0x70] sm:$0xff] %v1922
        %1968 = vst [vmem:[%s177 + $0x78] sm:$0xff] %v1936
        %s1969 = sand.u32 %s79, 1
        %s1970 = scalar_lea.sflag [#allocation4], %s1969
        %s1971 = sand.u32 %s79, 1
        %s1972 = smul.addr %s1971, 128
        %s1973 = scalar_lea.vmem [#allocation5], %s1972
        // Predicated region
        $region33: #{tpu_custom_call.1} parent=27 // pred_check
          %p1974 = pneg %p89
        $region34: #{tpu_custom_call.1} parent=27 // pred_check_branch
          %1976 = sbr.rel (%p1974) target = $region36
        $region35: #{tpu_custom_call.1} parent=27 // pred_region
          %s1977 = smul.u32 16, %s19
          %s1979 = ssub.s32 2048, 2048
          %1980 = vsyncadd %s1970, %s1979
          %s1981 = smul.addr %s1977, 128
          %s1982 = scalar_lea.hbm %s2, %s1981
          %s1983 = sshll.u32 %s1973, 4
          %s1984 = int_to_ptr.vmem [resolvable:$true] %s1983
          %1989 = dma.vmem_to_hbm [thread:$0]  %s1984, 2048, %s1982, %s1970, 128, 128, 8
        $region36: #{tpu_custom_call.1} parent=27 // pred_fallthru
          _
      $region28: #{tpu_custom_call.1} parent=5 // pred_fallthru
        _
      %p1990 = scmp.le.s32.totalorder 2, %s14
      // Predicated region
      $region37: #{tpu_custom_call.1} parent=5 // pred_check
        %p1991 = pneg %p1990
      $region38: #{tpu_custom_call.1} parent=5 // pred_check_branch
        %1993 = sbr.rel (%p1991) target = $region40
      $region39: #{tpu_custom_call.1} parent=5 // pred_region
        %s1994 = ssub.s32 %s14, 2
        // Predicated region
        $region41: #{tpu_custom_call.1} parent=39 // pred_check
          %p1995 = pneg %p95
        $region42: #{tpu_custom_call.1} parent=39 // pred_check_branch
          %1997 = sbr.rel (%p1995) target = $region44
        $region43: #{tpu_custom_call.1} parent=39 // pred_region
          %s1998 = sand.u32 %s80, 1
          %s1999 = scalar_lea.sflag [#allocation4], %s1998
          %s2000 = sand.u32 %s80, 1
          %s2001 = smul.addr %s2000, 128
          %s2002 = scalar_lea.vmem [#allocation5], %s2001
          %2003 = dma.done %s1999, 2048
        $region44: #{tpu_custom_call.1} parent=39 // pred_fallthru
          _
      $region40: #{tpu_custom_call.1} parent=5 // pred_fallthru
        _
    $region6: #{tpu_custom_call.1} parent=1 // loop_footer
      %s18 = sadd.s32 1, %s14
    $region7: #{tpu_custom_call.1} parent=1 // loop_footer_branch
      %13 = sbr.rel target = $region3
    $region8: #{tpu_custom_call.1} parent=1 // loop_exit
      _
    %2004 = vsyncpa [#allocation3], 1
    %s2005 = scalar_lea.sflag [#allocation3], 1
    %2006 = vsyncpa %s2005, 1
    %2007 = vsyncpa [#allocation4], 1
    %s2008 = scalar_lea.sflag [#allocation4], 1
    %2009 = vsyncpa %s2008, 1

</llo_original>
